<compile_context>
chip_gen: v7x
topology: tpu7x:2x2x1
jax: 0.10.0
libtpu: 0.0.40
codegen_flags: <defaults>
</compile_context>

<pallas_src>
import functools

import jax
import jax.numpy as jnp
from jax.experimental import pallas as pl
from jax.experimental.pallas import tpu as pltpu


def mhsa_kernel(xq_ref, xkv_ref, wq_ref, wk_ref, wv_ref, wo_ref,
                bq_ref, bk_ref, bv_ref, bo_ref, o_ref,
                *, num_heads, dim_head, compute_dtype):
    H, Dh = num_heads, dim_head
    cdt = compute_dtype

    xq = xq_ref[0].astype(cdt)     # (TQ, E) query rows of this tile
    xkv = xkv_ref[0].astype(cdt)   # (S,  E) full sequence (for K / V)
    TQ = xq.shape[0]
    S = xkv.shape[0]

    # --- Projections: one full-width MXU matmul each (bf16 in, f32 accum) ---
    q = jnp.dot(xq, wq_ref[...], preferred_element_type=jnp.float32) + bq_ref[...]
    k = jnp.dot(xkv, wk_ref[...], preferred_element_type=jnp.float32) + bk_ref[...]
    v = jnp.dot(xkv, wv_ref[...], preferred_element_type=jnp.float32) + bv_ref[...]

    # Fold 1/sqrt(Dh) into q: TQ*E multiplies instead of H*TQ*S on the scores.
    q = q * jnp.float32(1.0 / (Dh ** 0.5))

    # --- Batched-head attention: (H, T, Dh) operands, single einsums ---
    qh = q.reshape(TQ, H, Dh).transpose(1, 0, 2).astype(cdt)   # (H, TQ, Dh)
    kh = k.reshape(S, H, Dh).transpose(1, 0, 2).astype(cdt)    # (H, S,  Dh)
    vh = v.reshape(S, H, Dh).transpose(1, 0, 2).astype(cdt)    # (H, S,  Dh)

    s = jnp.einsum("hqd,hkd->hqk", qh, kh,
                   preferred_element_type=jnp.float32)          # (H, TQ, S) f32

    # Numerically stable softmax; all elementwise math in f32 (v5e-safe).
    m = jnp.max(s, axis=-1, keepdims=True)
    p = jnp.exp(s - m)
    inv_l = pl.reciprocal(jnp.sum(p, axis=-1, keepdims=True), approx=True)

    ctx = jnp.einsum("hqk,hkd->hqd", p.astype(cdt), vh,
                     preferred_element_type=jnp.float32)        # (H, TQ, Dh) f32
    ctx = ctx * inv_l                                           # denom as row scale
    ctx = ctx.transpose(1, 0, 2).reshape(TQ, H * Dh)            # (TQ, E), lane-dense

    out = jnp.dot(ctx.astype(cdt), wo_ref[...],
                  preferred_element_type=jnp.float32) + bo_ref[...]
    o_ref[0] = out.astype(o_ref.dtype)


def multi_head_self_attention(x, params, num_heads, *, q_tile=128,
                              compute_dtype=jnp.bfloat16):
    """x: [B, S, E] float32. params: wq/wk/wv/wo [E,E] and bq/bk/bv/bo [E]."""
    B, S, E = x.shape
    assert E % num_heads == 0
    dim_head = E // num_heads

    TQ = min(q_tile, S)
    assert S % TQ == 0 and (TQ == S or TQ % 8 == 0), (S, TQ)
    n_qt = S // TQ

    # MXU operands in compute_dtype (bf16 by default): halves weight VMEM/DMA
    # and doubles MXU throughput on v6e/v7x. Biases stay f32.
    wq = params["wq"].astype(compute_dtype)
    wk = params["wk"].astype(compute_dtype)
    wv = params["wv"].astype(compute_dtype)
    wo = params["wo"].astype(compute_dtype)
    bq = params["bq"].reshape(1, E).astype(jnp.float32)
    bk = params["bk"].reshape(1, E).astype(jnp.float32)
    bv = params["bv"].reshape(1, E).astype(jnp.float32)
    bo = params["bo"].reshape(1, E).astype(jnp.float32)

    kernel = functools.partial(mhsa_kernel, num_heads=num_heads,
                               dim_head=dim_head, compute_dtype=compute_dtype)

    # Constant index_maps -> weights/biases fetched once, stay VMEM-resident.
    w_spec = pl.BlockSpec((E, E), lambda b, t: (0, 0))
    b_spec = pl.BlockSpec((1, E), lambda b, t: (0, 0))
    xq_spec = pl.BlockSpec((1, TQ, E), lambda b, t: (b, t, 0))   # query tile
    xkv_spec = pl.BlockSpec((1, S, E), lambda b, t: (b, 0, 0))   # full seq for K/V
    o_spec = pl.BlockSpec((1, TQ, E), lambda b, t: (b, t, 0))
    # TODO(synk): for very long S, add a kv grid axis with online-softmax
    # accumulators (flash-style) instead of keeping full-S K/V per step.

    return pl.pallas_call(
        kernel,
        out_shape=jax.ShapeDtypeStruct((B, S, E), x.dtype),
        grid_spec=pltpu.PrefetchScalarGridSpec(
            num_scalar_prefetch=0,
            grid=(B, n_qt),
            in_specs=[xq_spec, xkv_spec,
                      w_spec, w_spec, w_spec, w_spec,
                      b_spec, b_spec, b_spec, b_spec],
            out_specs=o_spec,
        ),
        compiler_params=pltpu.CompilerParams(
            dimension_semantics=("parallel", "parallel"),
            vmem_limit_bytes=32 * 1024 * 1024,
        ),
    )(x, x, wq, wk, wv, wo, bq, bk, bv, bo)


def reference_mhsa(x, params, num_heads):
    """Pure-JAX f32 reference mirroring the PyTorch forward."""
    B, S, E = x.shape
    Dh = E // num_heads
    q = x @ params["wq"] + params["bq"]
    k = x @ params["wk"] + params["bk"]
    v = x @ params["wv"] + params["bv"]
    Q = q.reshape(B, S, num_heads, Dh)
    K = k.reshape(B, S, num_heads, Dh)
    V = v.reshape(B, S, num_heads, Dh)
    scores = jnp.einsum("bqhd,bkhd->bhqk", Q, K) / (Dh ** 0.5)
    attn = jax.nn.softmax(scores, axis=-1)
    ctx = jnp.einsum("bhqk,bkhd->bqhd", attn, V).reshape(B, S, E)
    return ctx @ params["wo"] + params["bo"]


def init_params(key, embed_dim):
    ks = jax.random.split(key, 8)
    s = 1.0 / (embed_dim ** 0.5)
    return {
        "wq": jax.random.uniform(ks[0], (embed_dim, embed_dim), jnp.float32, -s, s),
        "wk": jax.random.uniform(ks[1], (embed_dim, embed_dim), jnp.float32, -s, s),
        "wv": jax.random.uniform(ks[2], (embed_dim, embed_dim), jnp.float32, -s, s),
        "wo": jax.random.uniform(ks[3], (embed_dim, embed_dim), jnp.float32, -s, s),
        "bq": jax.random.uniform(ks[4], (embed_dim,), jnp.float32, -s, s),
        "bk": jax.random.uniform(ks[5], (embed_dim,), jnp.float32, -s, s),
        "bv": jax.random.uniform(ks[6], (embed_dim,), jnp.float32, -s, s),
        "bo": jax.random.uniform(ks[7], (embed_dim,), jnp.float32, -s, s),
    }


if __name__ == "__main__":
    B, S, E, H = 2, 8, 32, 4

    key = jax.random.PRNGKey(0)
    kx, kp = jax.random.split(key)
    x = jax.random.normal(kx, (B, S, E), dtype=jnp.float32)
    params = init_params(kp, E)

    ref = reference_mhsa(x, params, num_heads=H)

    # Structural check with f32 MXU operands (only approx-reciprocal error).
    out_f32 = jax.block_until_ready(
        multi_head_self_attention(x, params, num_heads=H,
                                  compute_dtype=jnp.float32))
    assert out_f32.shape == (B, S, E)
    assert jnp.allclose(out_f32, ref, atol=2e-2, rtol=2e-2), (
        float(jnp.max(jnp.abs(out_f32 - ref))))

    # Default fast path: bf16 MXU operands, f32 accumulation / softmax.
    out = jax.block_until_ready(
        multi_head_self_attention(x, params, num_heads=H))
    assert out.shape == (B, S, E)
    assert jnp.allclose(out, ref, atol=5e-2, rtol=5e-2), (
        float(jnp.max(jnp.abs(out - ref))))

    print("KERNEL_OK")
</pallas_src>

<mosaic_0001>
module attributes {stable_mosaic.version = 11 : i64} {
  func.func @mhsa_kernel(%arg0: i32, %arg1: i32, %arg2: memref<1x8x32xf32, #tpu.memory_space<vmem>>, %arg3: memref<1x8x32xf32, #tpu.memory_space<vmem>>, %arg4: memref<32x32xf32, #tpu.memory_space<vmem>>, %arg5: memref<32x32xf32, #tpu.memory_space<vmem>>, %arg6: memref<32x32xf32, #tpu.memory_space<vmem>>, %arg7: memref<32x32xf32, #tpu.memory_space<vmem>>, %arg8: memref<1x32xf32, #tpu.memory_space<vmem>>, %arg9: memref<1x32xf32, #tpu.memory_space<vmem>>, %arg10: memref<1x32xf32, #tpu.memory_space<vmem>>, %arg11: memref<1x32xf32, #tpu.memory_space<vmem>>, %arg12: memref<1x8x32xf32, #tpu.memory_space<vmem>>) attributes {dimension_semantics = [#tpu.dimension_semantics<parallel>, #tpu.dimension_semantics<parallel>], iteration_bounds = array<i64: 2, 1>, scalar_prefetch = 0 : i64, scratch_operands = 0 : i64, tpu.core_type = #tpu.core_type<tc>, window_params = [{transform_indices = @transform_0, window_bounds = array<i64: 1, 8, 32>}, {transform_indices = @transform_1, window_bounds = array<i64: 1, 8, 32>}, {pipeline_mode = #tpu.pipeline_mode<synchronous>, transform_indices = @transform_2, window_bounds = array<i64: 32, 32>}, {pipeline_mode = #tpu.pipeline_mode<synchronous>, transform_indices = @transform_3, window_bounds = array<i64: 32, 32>}, {pipeline_mode = #tpu.pipeline_mode<synchronous>, transform_indices = @transform_4, window_bounds = array<i64: 32, 32>}, {pipeline_mode = #tpu.pipeline_mode<synchronous>, transform_indices = @transform_5, window_bounds = array<i64: 32, 32>}, {pipeline_mode = #tpu.pipeline_mode<synchronous>, transform_indices = @transform_6, window_bounds = array<i64: 1, 32>}, {pipeline_mode = #tpu.pipeline_mode<synchronous>, transform_indices = @transform_7, window_bounds = array<i64: 1, 32>}, {pipeline_mode = #tpu.pipeline_mode<synchronous>, transform_indices = @transform_8, window_bounds = array<i64: 1, 32>}, {pipeline_mode = #tpu.pipeline_mode<synchronous>, transform_indices = @transform_9, window_bounds = array<i64: 1, 32>}, {transform_indices = @transform_10, window_bounds = array<i64: 1, 8, 32>}]} {
    %c0 = arith.constant 0 : index
    %c0_0 = arith.constant 0 : index
    %c0_1 = arith.constant 0 : index
    %0 = vector.load %arg2[%c0, %c0_0, %c0_1] : memref<1x8x32xf32, #tpu.memory_space<vmem>>, vector<1x8x32xf32>
    %1 = vector.shape_cast %0 : vector<1x8x32xf32> to vector<8x32xf32>
    %c0_2 = arith.constant 0 : index
    %c0_3 = arith.constant 0 : index
    %c0_4 = arith.constant 0 : index
    %2 = vector.load %arg3[%c0_2, %c0_3, %c0_4] : memref<1x8x32xf32, #tpu.memory_space<vmem>>, vector<1x8x32xf32>
    %3 = vector.shape_cast %2 : vector<1x8x32xf32> to vector<8x32xf32>
    %c0_5 = arith.constant 0 : index
    %c0_6 = arith.constant 0 : index
    %4 = vector.load %arg4[%c0_5, %c0_6] : memref<32x32xf32, #tpu.memory_space<vmem>>, vector<32x32xf32>
    %cst = arith.constant dense<0.000000e+00> : vector<8x32xf32>
    %5 = tpu.matmul %1, %4, %cst {dimension_numbers = #tpu.dot_dimension_numbers<[1], [0], [0], [1], [0, 0, 1, 1], [], []>} : vector<8x32xf32>, vector<32x32xf32>, vector<8x32xf32> -> vector<8x32xf32>
    %c0_7 = arith.constant 0 : index
    %c0_8 = arith.constant 0 : index
    %6 = vector.load %arg8[%c0_7, %c0_8] : memref<1x32xf32, #tpu.memory_space<vmem>>, vector<1x32xf32>
    %7 = vector.broadcast %6 : vector<1x32xf32> to vector<8x32xf32>
    %8 = arith.addf %5, %7 : vector<8x32xf32>
    %c0_9 = arith.constant 0 : index
    %c0_10 = arith.constant 0 : index
    %9 = vector.load %arg5[%c0_9, %c0_10] : memref<32x32xf32, #tpu.memory_space<vmem>>, vector<32x32xf32>
    %cst_11 = arith.constant dense<0.000000e+00> : vector<8x32xf32>
    %10 = tpu.matmul %3, %9, %cst_11 {dimension_numbers = #tpu.dot_dimension_numbers<[1], [0], [0], [1], [0, 0, 1, 1], [], []>} : vector<8x32xf32>, vector<32x32xf32>, vector<8x32xf32> -> vector<8x32xf32>
    %c0_12 = arith.constant 0 : index
    %c0_13 = arith.constant 0 : index
    %11 = vector.load %arg9[%c0_12, %c0_13] : memref<1x32xf32, #tpu.memory_space<vmem>>, vector<1x32xf32>
    %12 = vector.broadcast %11 : vector<1x32xf32> to vector<8x32xf32>
    %13 = arith.addf %10, %12 : vector<8x32xf32>
    %c0_14 = arith.constant 0 : index
    %c0_15 = arith.constant 0 : index
    %14 = vector.load %arg6[%c0_14, %c0_15] : memref<32x32xf32, #tpu.memory_space<vmem>>, vector<32x32xf32>
    %cst_16 = arith.constant dense<0.000000e+00> : vector<8x32xf32>
    %15 = tpu.matmul %3, %14, %cst_16 {dimension_numbers = #tpu.dot_dimension_numbers<[1], [0], [0], [1], [0, 0, 1, 1], [], []>} : vector<8x32xf32>, vector<32x32xf32>, vector<8x32xf32> -> vector<8x32xf32>
    %c0_17 = arith.constant 0 : index
    %c0_18 = arith.constant 0 : index
    %16 = vector.load %arg10[%c0_17, %c0_18] : memref<1x32xf32, #tpu.memory_space<vmem>>, vector<1x32xf32>
    %17 = vector.broadcast %16 : vector<1x32xf32> to vector<8x32xf32>
    %18 = arith.addf %15, %17 : vector<8x32xf32>
    %cst_19 = arith.constant 0.353553385 : f32
    %19 = vector.broadcast %cst_19 : f32 to vector<8x32xf32>
    %20 = arith.mulf %8, %19 : vector<8x32xf32>
    %21 = vector.shape_cast %20 : vector<8x32xf32> to vector<8x4x8xf32>
    %22 = tpu.transpose %21, [1, 0, 2] : vector<8x4x8xf32> -> vector<4x8x8xf32>
    %23 = vector.shape_cast %13 : vector<8x32xf32> to vector<8x4x8xf32>
    %24 = tpu.transpose %23, [1, 0, 2] : vector<8x4x8xf32> -> vector<4x8x8xf32>
    %25 = vector.shape_cast %18 : vector<8x32xf32> to vector<8x4x8xf32>
    %26 = tpu.transpose %25, [1, 0, 2] : vector<8x4x8xf32> -> vector<4x8x8xf32>
    "tpu.trace_start"() <{level = 10 : i32, message = "hqd,hkd->hqk"}> : () -> ()
    %cst_20 = arith.constant dense<0.000000e+00> : vector<4x8x8xf32>
    %27 = tpu.matmul %22, %24, %cst_20 {dimension_numbers = #tpu.dot_dimension_numbers<[2], [2], [1], [1], [0, 0, 0, 1, 1, 1], [0], [0]>} : vector<4x8x8xf32>, vector<4x8x8xf32>, vector<4x8x8xf32> -> vector<4x8x8xf32>
    "tpu.trace_stop"() : () -> ()
    %cst_21 = arith.constant dense<0xFF800000> : vector<4x8xf32>
    %28 = vector.multi_reduction <maximumf>, %27, %cst_21 [2] : vector<4x8x8xf32> to vector<4x8xf32>
    %29 = vector.shape_cast %28 : vector<4x8xf32> to vector<4x8x1xf32>
    %30 = vector.broadcast %29 : vector<4x8x1xf32> to vector<4x8x8xf32>
    %31 = arith.subf %27, %30 : vector<4x8x8xf32>
    %32 = math.exp %31 : vector<4x8x8xf32>
    %cst_22 = arith.constant dense<0.000000e+00> : vector<4x8xf32>
    %33 = vector.multi_reduction <add>, %32, %cst_22 [2] : vector<4x8x8xf32> to vector<4x8xf32>
    %34 = vector.shape_cast %33 : vector<4x8xf32> to vector<4x8x1xf32>
    %35 = tpu.reciprocal %34 {approx = true} : vector<4x8x1xf32> -> vector<4x8x1xf32>
    "tpu.trace_start"() <{level = 10 : i32, message = "hqk,hkd->hqd"}> : () -> ()
    %cst_23 = arith.constant dense<0.000000e+00> : vector<4x8x8xf32>
    %36 = tpu.matmul %32, %26, %cst_23 {dimension_numbers = #tpu.dot_dimension_numbers<[2], [1], [1], [2], [0, 0, 0, 1, 1, 2], [0], [0]>} : vector<4x8x8xf32>, vector<4x8x8xf32>, vector<4x8x8xf32> -> vector<4x8x8xf32>
    "tpu.trace_stop"() : () -> ()
    %37 = vector.broadcast %35 : vector<4x8x1xf32> to vector<4x8x8xf32>
    %38 = arith.mulf %36, %37 : vector<4x8x8xf32>
    %39 = tpu.transpose %38, [1, 0, 2] : vector<4x8x8xf32> -> vector<8x4x8xf32>
    %40 = vector.shape_cast %39 : vector<8x4x8xf32> to vector<8x32xf32>
    %c0_24 = arith.constant 0 : index
    %c0_25 = arith.constant 0 : index
    %41 = vector.load %arg7[%c0_24, %c0_25] : memref<32x32xf32, #tpu.memory_space<vmem>>, vector<32x32xf32>
    %cst_26 = arith.constant dense<0.000000e+00> : vector<8x32xf32>
    %42 = tpu.matmul %40, %41, %cst_26 {dimension_numbers = #tpu.dot_dimension_numbers<[1], [0], [0], [1], [0, 0, 1, 1], [], []>} : vector<8x32xf32>, vector<32x32xf32>, vector<8x32xf32> -> vector<8x32xf32>
    %c0_27 = arith.constant 0 : index
    %c0_28 = arith.constant 0 : index
    %43 = vector.load %arg11[%c0_27, %c0_28] : memref<1x32xf32, #tpu.memory_space<vmem>>, vector<1x32xf32>
    %44 = vector.broadcast %43 : vector<1x32xf32> to vector<8x32xf32>
    %45 = arith.addf %42, %44 : vector<8x32xf32>
    %c0_29 = arith.constant 0 : index
    %c0_30 = arith.constant 0 : index
    %c0_31 = arith.constant 0 : index
    %46 = vector.load %arg12[%c0_29, %c0_30, %c0_31] : memref<1x8x32xf32, #tpu.memory_space<vmem>>, vector<1x8x32xf32>
    %47 = vector.shape_cast %46 : vector<1x8x32xf32> to vector<8x32xf32>
    %48 = vector.shape_cast %45 : vector<8x32xf32> to vector<1x8x32xf32>
    tpu.vector_store %arg12[%c0_29, %c0_30, %c0_31], %48 {strides = array<i32>} : memref<1x8x32xf32, #tpu.memory_space<vmem>>, vector<1x8x32xf32>,
    return
  }
  func.func @transform_0(%arg0: i32, %arg1: i32) -> (i32, i32, i32) {
    %c0_i32 = arith.constant 0 : i32
    %c0_i32_0 = arith.constant 0 : i32
    return %arg0, %arg1, %c0_i32 : i32, i32, i32
  }
  func.func @transform_1(%arg0: i32, %arg1: i32) -> (i32, i32, i32) {
    %c0_i32 = arith.constant 0 : i32
    %c0_i32_0 = arith.constant 0 : i32
    %c0_i32_1 = arith.constant 0 : i32
    return %arg0, %c0_i32, %c0_i32_0 : i32, i32, i32
  }
  func.func @transform_2(%arg0: i32, %arg1: i32) -> (i32, i32) {
    %c0_i32 = arith.constant 0 : i32
    %c0_i32_0 = arith.constant 0 : i32
    %c0_i32_1 = arith.constant 0 : i32
    return %c0_i32, %c0_i32_0 : i32, i32
  }
  func.func @transform_3(%arg0: i32, %arg1: i32) -> (i32, i32) {
    %c0_i32 = arith.constant 0 : i32
    %c0_i32_0 = arith.constant 0 : i32
    %c0_i32_1 = arith.constant 0 : i32
    return %c0_i32, %c0_i32_0 : i32, i32
  }
  func.func @transform_4(%arg0: i32, %arg1: i32) -> (i32, i32) {
    %c0_i32 = arith.constant 0 : i32
    %c0_i32_0 = arith.constant 0 : i32
    %c0_i32_1 = arith.constant 0 : i32
    return %c0_i32, %c0_i32_0 : i32, i32
  }
  func.func @transform_5(%arg0: i32, %arg1: i32) -> (i32, i32) {
    %c0_i32 = arith.constant 0 : i32
    %c0_i32_0 = arith.constant 0 : i32
    %c0_i32_1 = arith.constant 0 : i32
    return %c0_i32, %c0_i32_0 : i32, i32
  }
  func.func @transform_6(%arg0: i32, %arg1: i32) -> (i32, i32) {
    %c0_i32 = arith.constant 0 : i32
    %c0_i32_0 = arith.constant 0 : i32
    %c0_i32_1 = arith.constant 0 : i32
    return %c0_i32, %c0_i32_0 : i32, i32
  }
  func.func @transform_7(%arg0: i32, %arg1: i32) -> (i32, i32) {
    %c0_i32 = arith.constant 0 : i32
    %c0_i32_0 = arith.constant 0 : i32
    %c0_i32_1 = arith.constant 0 : i32
    return %c0_i32, %c0_i32_0 : i32, i32
  }
  func.func @transform_8(%arg0: i32, %arg1: i32) -> (i32, i32) {
    %c0_i32 = arith.constant 0 : i32
    %c0_i32_0 = arith.constant 0 : i32
    %c0_i32_1 = arith.constant 0 : i32
    return %c0_i32, %c0_i32_0 : i32, i32
  }
  func.func @transform_9(%arg0: i32, %arg1: i32) -> (i32, i32) {
    %c0_i32 = arith.constant 0 : i32
    %c0_i32_0 = arith.constant 0 : i32
    %c0_i32_1 = arith.constant 0 : i32
    return %c0_i32, %c0_i32_0 : i32, i32
  }
  func.func @transform_10(%arg0: i32, %arg1: i32) -> (i32, i32, i32) {
    %c0_i32 = arith.constant 0 : i32
    %c0_i32_0 = arith.constant 0 : i32
    return %arg0, %arg1, %c0_i32 : i32, i32, i32
  }
}

</mosaic_0001>

<llo_original>
// kernel: tpu_custom_call.1
$region0: #{tpu_custom_call.1}
  #allocation0 [shape = 'u32[]', space=smem, size = 0x4, offset = 0x4, fixed_abs, tag = 'smem constant byte address 0x4 - core index']
  #allocation1 [shape = 'u32[144,128]{1,0:T(1,128)}', space=vmem, size = 0x12000, scoped, tag = 'internal scratch']
  %s0 = inlined_call_operand.hbm [shape: f32[2,8,32], index: 0, kind: input, shape index: {}]
  %s1 = inlined_call_operand.hbm [shape: f32[2,8,32], index: 1, kind: input, shape index: {}]
  %s2 = inlined_call_operand.hbm [shape: f32[32,32], index: 2, kind: input, shape index: {}]
  %s3 = inlined_call_operand.hbm [shape: f32[32,32], index: 3, kind: input, shape index: {}]
  %s4 = inlined_call_operand.hbm [shape: f32[32,32], index: 4, kind: input, shape index: {}]
  %s5 = inlined_call_operand.hbm [shape: f32[32,32], index: 5, kind: input, shape index: {}]
  %s6 = inlined_call_operand.vmem [shape: f32[1,32], index: 6, kind: input, shape index: {}]
  %s7 = inlined_call_operand.vmem [shape: f32[1,32], index: 7, kind: input, shape index: {}]
  %s8 = inlined_call_operand.vmem [shape: f32[1,32], index: 8, kind: input, shape index: {}]
  %s9 = inlined_call_operand.vmem [shape: f32[1,32], index: 9, kind: input, shape index: {}]
  %s10 = inlined_call_operand.hbm [shape: f32[2,8,32], index: 10, kind: output, shape index: {}]
  %s11 = sld [smem:[#allocation0]]
  $region97: #{tpu_custom_call.1} parent=0
    _
  %s13 = ssub.s32 1, %s11
  %s14 = scalar_select 0, %s13, %s11
  $region1: #{tpu_custom_call.1} parent=0
    #allocation2 [shape = 'u8[8192]{0}', space=vmem, size = 0x2000, scoped, tag = 'input window, operand 0']
    #allocation3 [shape = 's32[2]{0}', space=sflag, size = 0x8, scoped, tag = 'scoped memory for tpu_custom_call.1']
    #allocation4 [shape = 's32[2]{0}', space=sflag, size = 0x8, scoped, tag = 'scoped memory for tpu_custom_call.1']
    #allocation5 [shape = 'u8[8192]{0}', space=vmem, size = 0x2000, scoped, tag = 'input window, operand 1']
    #allocation6 [shape = 's32[2]{0}', space=sflag, size = 0x8, scoped, tag = 'scoped memory for tpu_custom_call.1']
    #allocation7 [shape = 'u8[16384]{0}', space=vmem, size = 0x4000, scoped, tag = 'input window, operand 2, single buffered']
    #allocation8 [shape = 'u8[16384]{0}', space=vmem, size = 0x4000, scoped, tag = 'input window, operand 3, single buffered']
    #allocation9 [shape = 's32[1]{0}', space=sflag, size = 0x4, scoped, tag = 'scoped memory for tpu_custom_call.1']
    #allocation10 [shape = 'u8[16384]{0}', space=vmem, size = 0x4000, scoped, tag = 'input window, operand 4, single buffered']
    #allocation11 [shape = 'u8[16384]{0}', space=vmem, size = 0x4000, scoped, tag = 'input window, operand 5, single buffered']
    #allocation12 [shape = 's32[1]{0}', space=sflag, size = 0x4, scoped, tag = 'scoped memory for tpu_custom_call.1']
    #allocation13 [shape = 'u8[8192]{0}', space=vmem, size = 0x2000, scoped, tag = 'output window, operand 0']
    %15 = vsyncpa [#allocation3], 0
    %s16 = scalar_lea.sflag [#allocation3], 1
    %17 = vsyncpa %s16, 0
    %18 = vsyncpa [#allocation6], 0
    %s19 = scalar_lea.sflag [#allocation6], 1
    %20 = vsyncpa %s19, 0
    %21 = vsyncpa [#allocation9], 0
    %22 = vsyncpa [#allocation12], 0
    %23 = vsyncpa [#allocation4], 0
    %s24 = scalar_lea.sflag [#allocation4], 1
    %25 = vsyncpa %s24, 0
    loop: start=0, step=1, limit=4
    $region2: #{tpu_custom_call.1} parent=1 // loop_pre_header
      _
    $region3: #{tpu_custom_call.1} parent=1 // loop_header
      %s27 = sphi 0, %s31
      %p28 = scmp.ge.s32.totalorder %s27, 4
      %s34 = sphi 0, %s46
      %s35 = sphi 0, %s42
      %s36 = sphi 0, %s34
      %s37 = sphi 0, %s35
      %s38 = sphi 0, %s36
      %s39 = sphi 0, %s37
      %s51 = sphi 0, %s53
      %s54 = sphi 0, %s51
      %s55 = sphi 0, %s54
      %s71 = sphi 0, %s55
      %s77 = sphi 0, %s79
      %s80 = sphi 0, %s77
      %s81 = sphi 0, %s80
      %s97 = sphi 0, %s81
      %s101 = sphi 0, %s101
      %s103 = sphi 0, %s101
      %s104 = sphi 0, %s103
      %s118 = sphi 0, %s104
      %s122 = sphi 0, %s122
      %s124 = sphi 0, %s122
      %s125 = sphi 0, %s124
      %s139 = sphi 0, %s125
      %s143 = sphi 0, %s143
      %s145 = sphi 0, %s143
      %s146 = sphi 0, %s145
      %s160 = sphi 0, %s146
      %s164 = sphi 0, %s164
      %s166 = sphi 0, %s164
      %s167 = sphi 0, %s166
      %s181 = sphi 0, %s167
      %s185 = sphi 0, %s185
      %s187 = sphi 0, %s185
      %s188 = sphi 0, %s187
      %s202 = sphi 0, %s188
      %s206 = sphi 0, %s206
      %s208 = sphi 0, %s206
      %s209 = sphi 0, %s208
      %s223 = sphi 0, %s209
      %s227 = sphi 0, %s227
      %s229 = sphi 0, %s227
      %s230 = sphi 0, %s229
      %s244 = sphi 0, %s230
      %s248 = sphi 0, %s248
      %s250 = sphi 0, %s248
      %s251 = sphi 0, %s250
      %s265 = sphi 0, %s251
      %s273 = sphi 0, %s275
      %s276 = sphi 0, %s273
      %s277 = sphi 0, %s276
      %s293 = sphi 0, %s277
    $region4: #{tpu_custom_call.1} parent=1 // loop_header_branch
      %30 = sbr.rel (%p28) target = $region8
    $region5: #{tpu_custom_call.1} parent=1 // loop_body
      %s32 = ssub.s32 %s27, 1
      %s33 = ssub.s32 %s27, 2
      %s40 = sadd.s32 1, %s35
      %p41 = scmp.ge.s32.totalorder %s40, 1
      %s42 = scalar_select %p41, 0, %s40
      %s43 = sadd.s32 1, %s34
      %s44 = scalar_select %p41, %s43, %s34
      %p45 = scmp.ge.s32.totalorder %s44, 2
      %s46 = scalar_select %p45, 0, %s44
      %s47 = ssub.s32 %s34, %s46
      %s48 = ssub.s32 %s35, %s42
      %s49 = sor.u32 %s47, %s48
      %p50 = scmp.eq.s32.totalorder %s49, 0
      %s52 = sadd.s32 %s51, 1
      %s53 = scalar_select %p50, %s51, %s52
      %p56 = pneg %p50
      %p57 = scmp.eq.s32.totalorder %s27, 1
      %p58 = por %p56, %p57
      %p59 = scmp.ne.s32.totalorder %s51, %s54
      %p60 = scmp.eq.s32.totalorder %s27, 0
      %p61 = por %p59, %p60
      %p62 = scmp.ne.s32.totalorder %s51, %s54
      %p63 = scmp.eq.s32.totalorder %s32, 1
      %p64 = por %p62, %p63
      %p65 = scmp.ne.s32.totalorder %s54, %s55
      %p66 = scmp.eq.s32.totalorder %s32, 0
      %p67 = por %p65, %p66
      %p68 = scmp.ne.s32.totalorder %s54, %s55
      %p69 = scmp.eq.s32.totalorder %s33, 1
      %p70 = por %p68, %p69
      %p72 = scmp.ne.s32.totalorder %s55, %s71
      %p73 = scmp.eq.s32.totalorder %s33, 0
      %p74 = por %p72, %p73
      %s75 = ssub.s32 %s34, %s46
      %p76 = scmp.eq.s32.totalorder %s75, 0
      %s78 = sadd.s32 %s77, 1
      %s79 = scalar_select %p76, %s77, %s78
      %p82 = pneg %p76
      %p83 = scmp.eq.s32.totalorder %s27, 1
      %p84 = por %p82, %p83
      %p85 = scmp.ne.s32.totalorder %s77, %s80
      %p86 = scmp.eq.s32.totalorder %s27, 0
      %p87 = por %p85, %p86
      %p88 = scmp.ne.s32.totalorder %s77, %s80
      %p89 = scmp.eq.s32.totalorder %s32, 1
      %p90 = por %p88, %p89
      %p91 = scmp.ne.s32.totalorder %s80, %s81
      %p92 = scmp.eq.s32.totalorder %s32, 0
      %p93 = por %p91, %p92
      %p94 = scmp.ne.s32.totalorder %s80, %s81
      %p95 = scmp.eq.s32.totalorder %s33, 1
      %p96 = por %p94, %p95
      %p98 = scmp.ne.s32.totalorder %s81, %s97
      %p99 = scmp.eq.s32.totalorder %s33, 0
      %p100 = por %p98, %p99
      %s102 = sadd.s32 %s101, 1
      %p105 = scmp.eq.s32.totalorder %s27, 1
      %p106 = scmp.ne.s32.totalorder %s101, %s103
      %p107 = scmp.eq.s32.totalorder %s27, 0
      %p108 = por %p106, %p107
      %p109 = scmp.ne.s32.totalorder %s101, %s103
      %p110 = scmp.eq.s32.totalorder %s32, 1
      %p111 = por %p109, %p110
      %p112 = scmp.ne.s32.totalorder %s103, %s104
      %p113 = scmp.eq.s32.totalorder %s32, 0
      %p114 = por %p112, %p113
      %p115 = scmp.ne.s32.totalorder %s103, %s104
      %p116 = scmp.eq.s32.totalorder %s33, 1
      %p117 = por %p115, %p116
      %p119 = scmp.ne.s32.totalorder %s104, %s118
      %p120 = scmp.eq.s32.totalorder %s33, 0
      %p121 = por %p119, %p120
      %s123 = sadd.s32 %s122, 1
      %p126 = scmp.eq.s32.totalorder %s27, 1
      %p127 = scmp.ne.s32.totalorder %s122, %s124
      %p128 = scmp.eq.s32.totalorder %s27, 0
      %p129 = por %p127, %p128
      %p130 = scmp.ne.s32.totalorder %s122, %s124
      %p131 = scmp.eq.s32.totalorder %s32, 1
      %p132 = por %p130, %p131
      %p133 = scmp.ne.s32.totalorder %s124, %s125
      %p134 = scmp.eq.s32.totalorder %s32, 0
      %p135 = por %p133, %p134
      %p136 = scmp.ne.s32.totalorder %s124, %s125
      %p137 = scmp.eq.s32.totalorder %s33, 1
      %p138 = por %p136, %p137
      %p140 = scmp.ne.s32.totalorder %s125, %s139
      %p141 = scmp.eq.s32.totalorder %s33, 0
      %p142 = por %p140, %p141
      %s144 = sadd.s32 %s143, 1
      %p147 = scmp.eq.s32.totalorder %s27, 1
      %p148 = scmp.ne.s32.totalorder %s143, %s145
      %p149 = scmp.eq.s32.totalorder %s27, 0
      %p150 = por %p148, %p149
      %p151 = scmp.ne.s32.totalorder %s143, %s145
      %p152 = scmp.eq.s32.totalorder %s32, 1
      %p153 = por %p151, %p152
      %p154 = scmp.ne.s32.totalorder %s145, %s146
      %p155 = scmp.eq.s32.totalorder %s32, 0
      %p156 = por %p154, %p155
      %p157 = scmp.ne.s32.totalorder %s145, %s146
      %p158 = scmp.eq.s32.totalorder %s33, 1
      %p159 = por %p157, %p158
      %p161 = scmp.ne.s32.totalorder %s146, %s160
      %p162 = scmp.eq.s32.totalorder %s33, 0
      %p163 = por %p161, %p162
      %s165 = sadd.s32 %s164, 1
      %p168 = scmp.eq.s32.totalorder %s27, 1
      %p169 = scmp.ne.s32.totalorder %s164, %s166
      %p170 = scmp.eq.s32.totalorder %s27, 0
      %p171 = por %p169, %p170
      %p172 = scmp.ne.s32.totalorder %s164, %s166
      %p173 = scmp.eq.s32.totalorder %s32, 1
      %p174 = por %p172, %p173
      %p175 = scmp.ne.s32.totalorder %s166, %s167
      %p176 = scmp.eq.s32.totalorder %s32, 0
      %p177 = por %p175, %p176
      %p178 = scmp.ne.s32.totalorder %s166, %s167
      %p179 = scmp.eq.s32.totalorder %s33, 1
      %p180 = por %p178, %p179
      %p182 = scmp.ne.s32.totalorder %s167, %s181
      %p183 = scmp.eq.s32.totalorder %s33, 0
      %p184 = por %p182, %p183
      %s186 = sadd.s32 %s185, 1
      %p189 = scmp.eq.s32.totalorder %s27, 1
      %p190 = scmp.ne.s32.totalorder %s185, %s187
      %p191 = scmp.eq.s32.totalorder %s27, 0
      %p192 = por %p190, %p191
      %p193 = scmp.ne.s32.totalorder %s185, %s187
      %p194 = scmp.eq.s32.totalorder %s32, 1
      %p195 = por %p193, %p194
      %p196 = scmp.ne.s32.totalorder %s187, %s188
      %p197 = scmp.eq.s32.totalorder %s32, 0
      %p198 = por %p196, %p197
      %p199 = scmp.ne.s32.totalorder %s187, %s188
      %p200 = scmp.eq.s32.totalorder %s33, 1
      %p201 = por %p199, %p200
      %p203 = scmp.ne.s32.totalorder %s188, %s202
      %p204 = scmp.eq.s32.totalorder %s33, 0
      %p205 = por %p203, %p204
      %s207 = sadd.s32 %s206, 1
      %p210 = scmp.eq.s32.totalorder %s27, 1
      %p211 = scmp.ne.s32.totalorder %s206, %s208
      %p212 = scmp.eq.s32.totalorder %s27, 0
      %p213 = por %p211, %p212
      %p214 = scmp.ne.s32.totalorder %s206, %s208
      %p215 = scmp.eq.s32.totalorder %s32, 1
      %p216 = por %p214, %p215
      %p217 = scmp.ne.s32.totalorder %s208, %s209
      %p218 = scmp.eq.s32.totalorder %s32, 0
      %p219 = por %p217, %p218
      %p220 = scmp.ne.s32.totalorder %s208, %s209
      %p221 = scmp.eq.s32.totalorder %s33, 1
      %p222 = por %p220, %p221
      %p224 = scmp.ne.s32.totalorder %s209, %s223
      %p225 = scmp.eq.s32.totalorder %s33, 0
      %p226 = por %p224, %p225
      %s228 = sadd.s32 %s227, 1
      %p231 = scmp.eq.s32.totalorder %s27, 1
      %p232 = scmp.ne.s32.totalorder %s227, %s229
      %p233 = scmp.eq.s32.totalorder %s27, 0
      %p234 = por %p232, %p233
      %p235 = scmp.ne.s32.totalorder %s227, %s229
      %p236 = scmp.eq.s32.totalorder %s32, 1
      %p237 = por %p235, %p236
      %p238 = scmp.ne.s32.totalorder %s229, %s230
      %p239 = scmp.eq.s32.totalorder %s32, 0
      %p240 = por %p238, %p239
      %p241 = scmp.ne.s32.totalorder %s229, %s230
      %p242 = scmp.eq.s32.totalorder %s33, 1
      %p243 = por %p241, %p242
      %p245 = scmp.ne.s32.totalorder %s230, %s244
      %p246 = scmp.eq.s32.totalorder %s33, 0
      %p247 = por %p245, %p246
      %s249 = sadd.s32 %s248, 1
      %p252 = scmp.eq.s32.totalorder %s27, 1
      %p253 = scmp.ne.s32.totalorder %s248, %s250
      %p254 = scmp.eq.s32.totalorder %s27, 0
      %p255 = por %p253, %p254
      %p256 = scmp.ne.s32.totalorder %s248, %s250
      %p257 = scmp.eq.s32.totalorder %s32, 1
      %p258 = por %p256, %p257
      %p259 = scmp.ne.s32.totalorder %s250, %s251
      %p260 = scmp.eq.s32.totalorder %s32, 0
      %p261 = por %p259, %p260
      %p262 = scmp.ne.s32.totalorder %s250, %s251
      %p263 = scmp.eq.s32.totalorder %s33, 1
      %p264 = por %p262, %p263
      %p266 = scmp.ne.s32.totalorder %s251, %s265
      %p267 = scmp.eq.s32.totalorder %s33, 0
      %p268 = por %p266, %p267
      %s269 = ssub.s32 %s34, %s46
      %s270 = ssub.s32 %s35, %s42
      %s271 = sor.u32 %s269, %s270
      %p272 = scmp.eq.s32.totalorder %s271, 0
      %s274 = sadd.s32 %s273, 1
      %s275 = scalar_select %p272, %s273, %s274
      %p278 = pneg %p272
      %p279 = scmp.eq.s32.totalorder %s27, 1
      %p280 = por %p278, %p279
      %p281 = scmp.ne.s32.totalorder %s273, %s276
      %p282 = scmp.eq.s32.totalorder %s27, 0
      %p283 = por %p281, %p282
      %p284 = scmp.ne.s32.totalorder %s273, %s276
      %p285 = scmp.eq.s32.totalorder %s32, 1
      %p286 = por %p284, %p285
      %p287 = scmp.ne.s32.totalorder %s276, %s277
      %p288 = scmp.eq.s32.totalorder %s32, 0
      %p289 = por %p287, %p288
      %p290 = scmp.ne.s32.totalorder %s276, %s277
      %p291 = scmp.eq.s32.totalorder %s33, 1
      %p292 = por %p290, %p291
      %p294 = scmp.ne.s32.totalorder %s277, %s293
      %p295 = scmp.eq.s32.totalorder %s33, 0
      %p296 = por %p294, %p295
      %p297 = scmp.le.s32.totalorder 1, %s27
      %p298 = scmp.lt.s32.totalorder %s27, 3
      %p299 = pnand %p297, %p298
      %p300 = pneg %p299
      // Predicated region
      $region9: #{tpu_custom_call.1} parent=5 // pred_check
        _
      $region10: #{tpu_custom_call.1} parent=5 // pred_check_branch
        %302 = sbr.rel (%p299) target = $region12
      $region11: #{tpu_custom_call.1} parent=5 // pred_region
        %s303 = ssub.s32 %s27, 1
        // Predicated region
        $region13: #{tpu_custom_call.1} parent=11 // pred_check
          %p304 = pneg %p114
        $region14: #{tpu_custom_call.1} parent=11 // pred_check_branch
          %306 = sbr.rel (%p304) target = $region16
        $region15: #{tpu_custom_call.1} parent=11 // pred_region
          %s308 = ssub.s32 512, 512
          %309 = vsyncadd [#allocation6], %s308
          %s310 = sshll.u32 [#allocation7], 4
          %s311 = int_to_ptr.vmem [resolvable:$true] %s310
          %316 = dma.hbm_to_vmem [thread:$0]  %s2, 512, %s311, [#allocation6], 128, 128, 8
        $region16: #{tpu_custom_call.1} parent=11 // pred_fallthru
          _
        // Predicated region
        $region17: #{tpu_custom_call.1} parent=11 // pred_check
          %p317 = pneg %p135
        $region18: #{tpu_custom_call.1} parent=11 // pred_check_branch
          %319 = sbr.rel (%p317) target = $region20
        $region19: #{tpu_custom_call.1} parent=11 // pred_region
          %s321 = ssub.s32 512, 512
          %322 = vsyncadd [#allocation9], %s321
          %s323 = sshll.u32 [#allocation8], 4
          %s324 = int_to_ptr.vmem [resolvable:$true] %s323
          %329 = dma.hbm_to_vmem [thread:$0]  %s3, 512, %s324, [#allocation9], 128, 128, 8
        $region20: #{tpu_custom_call.1} parent=11 // pred_fallthru
          _
        // Predicated region
        $region21: #{tpu_custom_call.1} parent=11 // pred_check
          %p330 = pneg %p156
        $region22: #{tpu_custom_call.1} parent=11 // pred_check_branch
          %332 = sbr.rel (%p330) target = $region24
        $region23: #{tpu_custom_call.1} parent=11 // pred_region
          %s334 = ssub.s32 512, 512
          %335 = vsyncadd [#allocation9], %s334
          %s336 = sshll.u32 [#allocation10], 4
          %s337 = int_to_ptr.vmem [resolvable:$true] %s336
          %342 = dma.hbm_to_vmem [thread:$0]  %s4, 512, %s337, [#allocation9], 128, 128, 8
        $region24: #{tpu_custom_call.1} parent=11 // pred_fallthru
          _
        // Predicated region
        $region25: #{tpu_custom_call.1} parent=11 // pred_check
          %p343 = pneg %p177
        $region26: #{tpu_custom_call.1} parent=11 // pred_check_branch
          %345 = sbr.rel (%p343) target = $region28
        $region27: #{tpu_custom_call.1} parent=11 // pred_region
          %s347 = ssub.s32 512, 512
          %348 = vsyncadd [#allocation12], %s347
          %s349 = sshll.u32 [#allocation11], 4
          %s350 = int_to_ptr.vmem [resolvable:$true] %s349
          %355 = dma.hbm_to_vmem [thread:$0]  %s5, 512, %s350, [#allocation12], 128, 128, 8
        $region28: #{tpu_custom_call.1} parent=11 // pred_fallthru
          _
        // Predicated region
        $region29: #{tpu_custom_call.1} parent=11 // pred_check
          %p356 = pneg %p198
        $region30: #{tpu_custom_call.1} parent=11 // pred_check_branch
          %358 = sbr.rel (%p356) target = $region32
        $region31: #{tpu_custom_call.1} parent=11 // pred_region
          _
        $region32: #{tpu_custom_call.1} parent=11 // pred_fallthru
          _
        // Predicated region
        $region33: #{tpu_custom_call.1} parent=11 // pred_check
          %p359 = pneg %p219
        $region34: #{tpu_custom_call.1} parent=11 // pred_check_branch
          %361 = sbr.rel (%p359) target = $region36
        $region35: #{tpu_custom_call.1} parent=11 // pred_region
          _
        $region36: #{tpu_custom_call.1} parent=11 // pred_fallthru
          _
        // Predicated region
        $region37: #{tpu_custom_call.1} parent=11 // pred_check
          %p362 = pneg %p240
        $region38: #{tpu_custom_call.1} parent=11 // pred_check_branch
          %364 = sbr.rel (%p362) target = $region40
        $region39: #{tpu_custom_call.1} parent=11 // pred_region
          _
        $region40: #{tpu_custom_call.1} parent=11 // pred_fallthru
          _
        // Predicated region
        $region41: #{tpu_custom_call.1} parent=11 // pred_check
          %p365 = pneg %p261
        $region42: #{tpu_custom_call.1} parent=11 // pred_check_branch
          %367 = sbr.rel (%p365) target = $region44
        $region43: #{tpu_custom_call.1} parent=11 // pred_region
          _
        $region44: #{tpu_custom_call.1} parent=11 // pred_fallthru
          _
      $region12: #{tpu_custom_call.1} parent=5 // pred_fallthru
        _
      %p368 = scmp.lt.s32.totalorder %s27, 2
      // Predicated region
      $region45: #{tpu_custom_call.1} parent=5 // pred_check
        %p369 = pneg %p368
      $region46: #{tpu_custom_call.1} parent=5 // pred_check_branch
        %371 = sbr.rel (%p369) target = $region48
      $region47: #{tpu_custom_call.1} parent=5 // pred_region
        // Predicated region
        $region49: #{tpu_custom_call.1} parent=47 // pred_check
          %p372 = pneg %p61
        $region50: #{tpu_custom_call.1} parent=47 // pred_check_branch
          %374 = sbr.rel (%p372) target = $region52
        $region51: #{tpu_custom_call.1} parent=47 // pred_region
          %s375 = sand.u32 %s51, 1
          %s376 = scalar_lea.sflag [#allocation3], %s375
          %s377 = sand.u32 %s51, 1
          %s378 = smul.addr %s377, 8
          %s379 = scalar_lea.vmem [#allocation2], %s378
          %s381 = ssub.s32 128, 128
          %382 = vsyncadd %s376, %s381
          %s383 = sadd.s32 %s35, %s34
          %s384 = smul.addr %s383, 128
          %s385 = scalar_lea.hbm %s0, %s384
          %s387 = sshll.u32 %s379, 4
          %s388 = int_to_ptr.vmem [resolvable:$true] %s387
          %390 = dma.hbm_to_vmem [thread:$0]  %s385, 128, %s388, %s376
        $region52: #{tpu_custom_call.1} parent=47 // pred_fallthru
          _
        // Predicated region
        $region53: #{tpu_custom_call.1} parent=47 // pred_check
          %p391 = pneg %p87
        $region54: #{tpu_custom_call.1} parent=47 // pred_check_branch
          %393 = sbr.rel (%p391) target = $region56
        $region55: #{tpu_custom_call.1} parent=47 // pred_region
          %s394 = sand.u32 %s27, 1
          %s395 = scalar_lea.sflag [#allocation6], %s394
          %s396 = sand.u32 %s77, 1
          %s397 = smul.addr %s396, 8
          %s398 = scalar_lea.vmem [#allocation5], %s397
          %s400 = ssub.s32 128, 128
          %401 = vsyncadd %s395, %s400
          %s402 = smul.addr %s34, 128
          %s403 = scalar_lea.hbm %s1, %s402
          %s405 = sshll.u32 %s398, 4
          %s406 = int_to_ptr.vmem [resolvable:$true] %s405
          %408 = dma.hbm_to_vmem [thread:$0]  %s403, 128, %s406, %s395
        $region56: #{tpu_custom_call.1} parent=47 // pred_fallthru
          _
      $region48: #{tpu_custom_call.1} parent=5 // pred_fallthru
        _
      %p409 = scmp.le.s32.totalorder 1, %s27
      %p410 = scmp.lt.s32.totalorder %s27, 3
      %p411 = pnand %p409, %p410
      %p412 = pneg %p411
      // Predicated region
      $region57: #{tpu_custom_call.1} parent=5 // pred_check
        _
      $region58: #{tpu_custom_call.1} parent=5 // pred_check_branch
        %414 = sbr.rel (%p411) target = $region60
      $region59: #{tpu_custom_call.1} parent=5 // pred_region
        %s415 = ssub.s32 %s27, 1
        %s416 = sand.u32 %s54, 1
        %s417 = scalar_lea.sflag [#allocation3], %s416
        %s418 = sand.u32 %s54, 1
        %s419 = smul.addr %s418, 8
        %s420 = scalar_lea.vmem [#allocation2], %s419
        // Predicated region
        $region61: #{tpu_custom_call.1} parent=59 // pred_check
          %p421 = pneg %p67
        $region62: #{tpu_custom_call.1} parent=59 // pred_check_branch
          %423 = sbr.rel (%p421) target = $region64
        $region63: #{tpu_custom_call.1} parent=59 // pred_region
          %424 = dma.done %s417, 128
        $region64: #{tpu_custom_call.1} parent=59 // pred_fallthru
          _
        %s425 = sand.u32 %s32, 1
        %s426 = scalar_lea.sflag [#allocation6], %s425
        %s427 = sand.u32 %s80, 1
        %s428 = smul.addr %s427, 8
        %s429 = scalar_lea.vmem [#allocation5], %s428
        // Predicated region
        $region65: #{tpu_custom_call.1} parent=59 // pred_check
          %p430 = pneg %p93
        $region66: #{tpu_custom_call.1} parent=59 // pred_check_branch
          %432 = sbr.rel (%p430) target = $region68
        $region67: #{tpu_custom_call.1} parent=59 // pred_region
          %433 = dma.done %s426, 128
        $region68: #{tpu_custom_call.1} parent=59 // pred_fallthru
          _
        // Predicated region
        $region69: #{tpu_custom_call.1} parent=59 // pred_check
          %p434 = pneg %p114
        $region70: #{tpu_custom_call.1} parent=59 // pred_check_branch
          %436 = sbr.rel (%p434) target = $region72
        $region71: #{tpu_custom_call.1} parent=59 // pred_region
          %437 = dma.done [#allocation6], 512
        $region72: #{tpu_custom_call.1} parent=59 // pred_fallthru
          _
        // Predicated region
        $region73: #{tpu_custom_call.1} parent=59 // pred_check
          %p438 = pneg %p135
        $region74: #{tpu_custom_call.1} parent=59 // pred_check_branch
          %440 = sbr.rel (%p438) target = $region76
        $region75: #{tpu_custom_call.1} parent=59 // pred_region
          %441 = dma.done [#allocation9], 512
        $region76: #{tpu_custom_call.1} parent=59 // pred_fallthru
          _
        // Predicated region
        $region77: #{tpu_custom_call.1} parent=59 // pred_check
          %p442 = pneg %p156
        $region78: #{tpu_custom_call.1} parent=59 // pred_check_branch
          %444 = sbr.rel (%p442) target = $region80
        $region79: #{tpu_custom_call.1} parent=59 // pred_region
          %445 = dma.done [#allocation9], 512
        $region80: #{tpu_custom_call.1} parent=59 // pred_fallthru
          _
        // Predicated region
        $region81: #{tpu_custom_call.1} parent=59 // pred_check
          %p446 = pneg %p177
        $region82: #{tpu_custom_call.1} parent=59 // pred_check_branch
          %448 = sbr.rel (%p446) target = $region84
        $region83: #{tpu_custom_call.1} parent=59 // pred_region
          %449 = dma.done [#allocation12], 512
        $region84: #{tpu_custom_call.1} parent=59 // pred_fallthru
          _
        %s450 = sand.u32 %s54, 1
        %s451 = scalar_lea.sflag [#allocation3], %s450
        %s452 = sand.u32 %s54, 1
        %s453 = smul.addr %s452, 8
        %s454 = scalar_lea.vmem [#allocation2], %s453
        %p455 = pneg %p67
        %p456 = pneg %p64
        %s457 = sand.u32 %s32, 1
        %s458 = scalar_lea.sflag [#allocation6], %s457
        %s459 = sand.u32 %s80, 1
        %s460 = smul.addr %s459, 8
        %s461 = scalar_lea.vmem [#allocation5], %s460
        %p462 = pneg %p93
        %p463 = pneg %p90
        %p464 = pneg %p114
        %p465 = pneg %p111
        %p466 = pneg %p135
        %p467 = pneg %p132
        %p468 = pneg %p156
        %p469 = pneg %p153
        %p470 = pneg %p177
        %p471 = pneg %p174
        %p472 = pneg %p198
        %p473 = pneg %p195
        %p474 = pneg %p219
        %p475 = pneg %p216
        %p476 = pneg %p240
        %p477 = pneg %p237
        %p478 = pneg %p261
        %p479 = pneg %p258
        %p480 = pneg %p289
        %p481 = pneg %p286
        %s482 = sand.u32 %s276, 1
        %s483 = scalar_lea.sflag [#allocation4], %s482
        %s484 = sand.u32 %s276, 1
        %s485 = smul.addr %s484, 8
        %s486 = scalar_lea.vmem [#allocation13], %s485
        %v487 = vld [vmem:[%s420] sm:$0xff]
        %v488 = vld [vmem:[%s429] sm:$0xff]
        %v489 = vld [vmem:[#allocation7] sm:$0xff]
        %v490 = vld [vmem:[#allocation7 + $0x8] sm:$0xff]
        %v491 = vld [vmem:[#allocation7 + $0x10] sm:$0xff]
        %v492 = vld [vmem:[#allocation7 + $0x18] sm:$0xff]
        %v493 = vld [vmem:[%s6] sm:$0x1]
        %v495 = vlaneseq
        %v496 = vshrl.u32 %v495, 7
        %v497 = vsub.s32 0, %v496
        %v498 = vrot.slane %v493, %v497
        %vm500 = vcmask 261120
        %v502 = vsel %vm500, %v487, 0
        %504 = vmatprep.subr.mxu0 0.0
        %505 = vmatpush1.msra.mxu0 %v489
        %506 = vmatprep.subr.mxu0 0.0
        %507 = vmatpush1.msra.mxu0 %v490
        %508 = vmatprep.subr.mxu0 0.0
        %509 = vmatpush1.msra.mxu0 %v491
        %510 = vmatprep.subr.mxu0 0.0
        %511 = vmatpush1.msra.mxu0 %v492
        %512 = vmatprep.subr.mxu0 0.0
        %513 = vmatpush1.msra.mxu0 0.0
        %514 = vmatprep.subr.mxu0 0.0
        %515 = vmatpush1.msra.mxu0 0.0
        %516 = vmatprep.subr.mxu0 0.0
        %517 = vmatpush1.msra.mxu0 0.0
        %518 = vmatprep.subr.mxu0 0.0
        %519 = vmatpush1.msra.mxu0 0.0
        %520 = vmatprep.subr.mxu0 0.0
        %521 = vmatpush1.msra.mxu0 0.0
        %522 = vmatprep.subr.mxu0 0.0
        %523 = vmatpush1.msra.mxu0 0.0
        %524 = vmatprep.subr.mxu0 0.0
        %525 = vmatpush1.msra.mxu0 0.0
        %526 = vmatprep.subr.mxu0 0.0
        %527 = vmatpush1.msra.mxu0 0.0
        %528 = vmatprep.subr.mxu0 0.0
        %529 = vmatpush1.msra.mxu0 0.0
        %530 = vmatprep.subr.mxu0 0.0
        %531 = vmatpush1.msra.mxu0 0.0
        %532 = vmatprep.subr.mxu0 0.0
        %533 = vmatpush1.msra.mxu0 0.0
        %534 = vmatprep.subr.mxu0 0.0
        %535 = vmatpush1.msra.mxu0 0.0
        %536 = vmatprep.subr.mxu0 0.0
        %537 = vmatpush1.msra.mxu0 0.0
        %538 = vmatprep.subr.mxu0 0.0
        %539 = vmatpush1.msra.mxu0 0.0
        %540 = vmatprep.subr.mxu0 0.0
        %541 = vmatpush1.msra.mxu0 0.0
        %542 = vmatprep.subr.mxu0 0.0
        %543 = vmatpush1.msra.mxu0 0.0
        %544 = vmatprep.subr.mxu0 0.0
        %545 = vmatpush1.msra.mxu0 0.0
        %546 = vmatprep.subr.mxu0 0.0
        %547 = vmatpush1.msra.mxu0 0.0
        %548 = vmatprep.subr.mxu0 0.0
        %549 = vmatpush1.msra.mxu0 0.0
        %550 = vmatprep.subr.mxu0 0.0
        %551 = vmatpush1.msra.mxu0 0.0
        %552 = vmatprep.subr.mxu0 0.0
        %553 = vmatpush1.msra.mxu0 0.0
        %554 = vmatprep.subr.mxu0 0.0
        %555 = vmatpush1.msra.mxu0 0.0
        %556 = vmatprep.subr.mxu0 0.0
        %557 = vmatpush1.msra.mxu0 0.0
        %558 = vmatprep.subr.mxu0 0.0
        %559 = vmatpush1.msra.mxu0 0.0
        %560 = vmatprep.subr.mxu0 0.0
        %561 = vmatpush1.msra.mxu0 0.0
        %562 = vmatprep.subr.mxu0 0.0
        %563 = vmatpush1.msra.mxu0 0.0
        %564 = vmatprep.subr.mxu0 0.0
        %565 = vmatpush1.msra.mxu0 0.0
        %566 = vmatprep.subr.mxu0 0.0
        %567 = vmatpush1.msra.mxu0 0.0
        %568 = vmatprep.mubr.f32.mxu0 0.0
        %569 = vmatmul.mubr.f32.gmra.mrb[0].mxu0 %v502
        %v570 = vpop.f32.mrb[0].mxu0
        %v571 = vadd.f32 %v498, %v570
        %v572 = vpop.f32.mrb[0].mxu0
        %573 = vdwg.mxu0
        %v574 = vld [vmem:[#allocation8] sm:$0xff]
        %v575 = vld [vmem:[#allocation8 + $0x8] sm:$0xff]
        %v576 = vld [vmem:[#allocation8 + $0x10] sm:$0xff]
        %v577 = vld [vmem:[#allocation8 + $0x18] sm:$0xff]
        %v578 = vld [vmem:[%s7] sm:$0x1]
        %v580 = vlaneseq
        %v581 = vshrl.u32 %v580, 7
        %v582 = vsub.s32 0, %v581
        %v583 = vrot.slane %v578, %v582
        %v586 = vsel %vm500, %v488, 0
        %588 = vmatprep.subr.mxu0 0.0
        %589 = vmatpush1.msra.mxu0 %v574
        %590 = vmatprep.subr.mxu0 0.0
        %591 = vmatpush1.msra.mxu0 %v575
        %592 = vmatprep.subr.mxu0 0.0
        %593 = vmatpush1.msra.mxu0 %v576
        %594 = vmatprep.subr.mxu0 0.0
        %595 = vmatpush1.msra.mxu0 %v577
        %596 = vmatprep.subr.mxu0 0.0
        %597 = vmatpush1.msra.mxu0 0.0
        %598 = vmatprep.subr.mxu0 0.0
        %599 = vmatpush1.msra.mxu0 0.0
        %600 = vmatprep.subr.mxu0 0.0
        %601 = vmatpush1.msra.mxu0 0.0
        %602 = vmatprep.subr.mxu0 0.0
        %603 = vmatpush1.msra.mxu0 0.0
        %604 = vmatprep.subr.mxu0 0.0
        %605 = vmatpush1.msra.mxu0 0.0
        %606 = vmatprep.subr.mxu0 0.0
        %607 = vmatpush1.msra.mxu0 0.0
        %608 = vmatprep.subr.mxu0 0.0
        %609 = vmatpush1.msra.mxu0 0.0
        %610 = vmatprep.subr.mxu0 0.0
        %611 = vmatpush1.msra.mxu0 0.0
        %612 = vmatprep.subr.mxu0 0.0
        %613 = vmatpush1.msra.mxu0 0.0
        %614 = vmatprep.subr.mxu0 0.0
        %615 = vmatpush1.msra.mxu0 0.0
        %616 = vmatprep.subr.mxu0 0.0
        %617 = vmatpush1.msra.mxu0 0.0
        %618 = vmatprep.subr.mxu0 0.0
        %619 = vmatpush1.msra.mxu0 0.0
        %620 = vmatprep.subr.mxu0 0.0
        %621 = vmatpush1.msra.mxu0 0.0
        %622 = vmatprep.subr.mxu0 0.0
        %623 = vmatpush1.msra.mxu0 0.0
        %624 = vmatprep.subr.mxu0 0.0
        %625 = vmatpush1.msra.mxu0 0.0
        %626 = vmatprep.subr.mxu0 0.0
        %627 = vmatpush1.msra.mxu0 0.0
        %628 = vmatprep.subr.mxu0 0.0
        %629 = vmatpush1.msra.mxu0 0.0
        %630 = vmatprep.subr.mxu0 0.0
        %631 = vmatpush1.msra.mxu0 0.0
        %632 = vmatprep.subr.mxu0 0.0
        %633 = vmatpush1.msra.mxu0 0.0
        %634 = vmatprep.subr.mxu0 0.0
        %635 = vmatpush1.msra.mxu0 0.0
        %636 = vmatprep.subr.mxu0 0.0
        %637 = vmatpush1.msra.mxu0 0.0
        %638 = vmatprep.subr.mxu0 0.0
        %639 = vmatpush1.msra.mxu0 0.0
        %640 = vmatprep.subr.mxu0 0.0
        %641 = vmatpush1.msra.mxu0 0.0
        %642 = vmatprep.subr.mxu0 0.0
        %643 = vmatpush1.msra.mxu0 0.0
        %644 = vmatprep.subr.mxu0 0.0
        %645 = vmatpush1.msra.mxu0 0.0
        %646 = vmatprep.subr.mxu0 0.0
        %647 = vmatpush1.msra.mxu0 0.0
        %648 = vmatprep.subr.mxu0 0.0
        %649 = vmatpush1.msra.mxu0 0.0
        %650 = vmatprep.subr.mxu0 0.0
        %651 = vmatpush1.msra.mxu0 0.0
        %652 = vmatprep.mubr.f32.mxu0 0.0
        %653 = vmatmul.mubr.f32.gmra.mrb[0].mxu0 %v586
        %v654 = vpop.f32.mrb[0].mxu0
        %v655 = vadd.f32 %v583, %v654
        %v656 = vpop.f32.mrb[0].mxu0
        %657 = vdwg.mxu0
        %v658 = vld [vmem:[#allocation10] sm:$0xff]
        %v659 = vld [vmem:[#allocation10 + $0x8] sm:$0xff]
        %v660 = vld [vmem:[#allocation10 + $0x10] sm:$0xff]
        %v661 = vld [vmem:[#allocation10 + $0x18] sm:$0xff]
        %v662 = vld [vmem:[%s8] sm:$0x1]
        %v664 = vlaneseq
        %v665 = vshrl.u32 %v664, 7
        %v666 = vsub.s32 0, %v665
        %v667 = vrot.slane %v662, %v666
        %669 = vmatprep.subr.mxu0 0.0
        %670 = vmatpush1.msra.mxu0 %v658
        %671 = vmatprep.subr.mxu0 0.0
        %672 = vmatpush1.msra.mxu0 %v659
        %673 = vmatprep.subr.mxu0 0.0
        %674 = vmatpush1.msra.mxu0 %v660
        %675 = vmatprep.subr.mxu0 0.0
        %676 = vmatpush1.msra.mxu0 %v661
        %677 = vmatprep.subr.mxu0 0.0
        %678 = vmatpush1.msra.mxu0 0.0
        %679 = vmatprep.subr.mxu0 0.0
        %680 = vmatpush1.msra.mxu0 0.0
        %681 = vmatprep.subr.mxu0 0.0
        %682 = vmatpush1.msra.mxu0 0.0
        %683 = vmatprep.subr.mxu0 0.0
        %684 = vmatpush1.msra.mxu0 0.0
        %685 = vmatprep.subr.mxu0 0.0
        %686 = vmatpush1.msra.mxu0 0.0
        %687 = vmatprep.subr.mxu0 0.0
        %688 = vmatpush1.msra.mxu0 0.0
        %689 = vmatprep.subr.mxu0 0.0
        %690 = vmatpush1.msra.mxu0 0.0
        %691 = vmatprep.subr.mxu0 0.0
        %692 = vmatpush1.msra.mxu0 0.0
        %693 = vmatprep.subr.mxu0 0.0
        %694 = vmatpush1.msra.mxu0 0.0
        %695 = vmatprep.subr.mxu0 0.0
        %696 = vmatpush1.msra.mxu0 0.0
        %697 = vmatprep.subr.mxu0 0.0
        %698 = vmatpush1.msra.mxu0 0.0
        %699 = vmatprep.subr.mxu0 0.0
        %700 = vmatpush1.msra.mxu0 0.0
        %701 = vmatprep.subr.mxu0 0.0
        %702 = vmatpush1.msra.mxu0 0.0
        %703 = vmatprep.subr.mxu0 0.0
        %704 = vmatpush1.msra.mxu0 0.0
        %705 = vmatprep.subr.mxu0 0.0
        %706 = vmatpush1.msra.mxu0 0.0
        %707 = vmatprep.subr.mxu0 0.0
        %708 = vmatpush1.msra.mxu0 0.0
        %709 = vmatprep.subr.mxu0 0.0
        %710 = vmatpush1.msra.mxu0 0.0
        %711 = vmatprep.subr.mxu0 0.0
        %712 = vmatpush1.msra.mxu0 0.0
        %713 = vmatprep.subr.mxu0 0.0
        %714 = vmatpush1.msra.mxu0 0.0
        %715 = vmatprep.subr.mxu0 0.0
        %716 = vmatpush1.msra.mxu0 0.0
        %717 = vmatprep.subr.mxu0 0.0
        %718 = vmatpush1.msra.mxu0 0.0
        %719 = vmatprep.subr.mxu0 0.0
        %720 = vmatpush1.msra.mxu0 0.0
        %721 = vmatprep.subr.mxu0 0.0
        %722 = vmatpush1.msra.mxu0 0.0
        %723 = vmatprep.subr.mxu0 0.0
        %724 = vmatpush1.msra.mxu0 0.0
        %725 = vmatprep.subr.mxu0 0.0
        %726 = vmatpush1.msra.mxu0 0.0
        %727 = vmatprep.subr.mxu0 0.0
        %728 = vmatpush1.msra.mxu0 0.0
        %729 = vmatprep.subr.mxu0 0.0
        %730 = vmatpush1.msra.mxu0 0.0
        %731 = vmatprep.subr.mxu0 0.0
        %732 = vmatpush1.msra.mxu0 0.0
        %733 = vmatprep.mubr.f32.mxu0 0.0
        %734 = vmatmul.mubr.f32.gmra.mrb[0].mxu0 %v586
        %v735 = vpop.f32.mrb[0].mxu0
        %v736 = vadd.f32 %v667, %v735
        %v737 = vpop.f32.mrb[0].mxu0
        %738 = vdwg.mxu0
        %v739 = vmul.f32 %v571, 0.35355338
        %741 = vrot.lane.b32.xlu0 %v739, 120
        %v742 = vpop.permute.xlu0 %741
        %744 = vrot.lane.b32.xlu0 %v739, 112
        %v745 = vpop.permute.xlu0 %744
        %747 = vrot.lane.b32.xlu0 %v739, 104
        %v748 = vpop.permute.xlu0 %747
        %v750 = vcombine.low %v739, %v745
        %v751 = vcombine.high %v739, %v745
        %v753 = vunpack.c.l.s4 1983009808
        %v754 = vunpack.c.0.s8 %v753
        %v755 = vlaneseq
        %v756 = vshrl.u32 %v755, 7
        %v757 = vsub.s32 %v754, %v756
        %v758 = vrot.slane %v750, %v757
        %v760 = vunpack.c.l.s4 1983009808
        %v761 = vunpack.c.0.s8 %v760
        %v762 = vlaneseq
        %v763 = vshrl.u32 %v762, 7
        %v764 = vsub.s32 %v761, %v763
        %v765 = vrot.slane %v751, %v764
        %v766 = vcombine.low %v742, %v748
        %v767 = vcombine.high %v742, %v748
        %v769 = vunpack.c.l.s4 1983009808
        %v770 = vunpack.c.0.s8 %v769
        %v771 = vlaneseq
        %v772 = vshrl.u32 %v771, 7
        %v773 = vsub.s32 %v770, %v772
        %v774 = vrot.slane %v766, %v773
        %v776 = vunpack.c.l.s4 1983009808
        %v777 = vunpack.c.0.s8 %v776
        %v778 = vlaneseq
        %v779 = vshrl.u32 %v778, 7
        %v780 = vsub.s32 %v777, %v779
        %v781 = vrot.slane %v767, %v780
        %v782 = vcombine.low %v758, %v774
        %v783 = vcombine.high %v758, %v774
        %v785 = vunpack.c.l.s4 1934713408
        %v786 = vunpack.c.0.s8 %v785
        %v787 = vlaneseq
        %v788 = vshrl.u32 %v787, 7
        %v789 = vsub.s32 %v786, %v788
        %v790 = vrot.slane %v782, %v789
        %v792 = vunpack.c.l.s4 1934713408
        %v793 = vunpack.c.0.s8 %v792
        %v794 = vlaneseq
        %v795 = vshrl.u32 %v794, 7
        %v796 = vsub.s32 %v793, %v795
        %v797 = vrot.slane %v783, %v796
        %v798 = vcombine.low %v765, %v781
        %v799 = vcombine.high %v765, %v781
        %v801 = vunpack.c.l.s4 1934713408
        %v802 = vunpack.c.0.s8 %v801
        %v803 = vlaneseq
        %v804 = vshrl.u32 %v803, 7
        %v805 = vsub.s32 %v802, %v804
        %v806 = vrot.slane %v798, %v805
        %v808 = vunpack.c.l.s4 1934713408
        %v809 = vunpack.c.0.s8 %v808
        %v810 = vlaneseq
        %v811 = vshrl.u32 %v810, 7
        %v812 = vsub.s32 %v809, %v811
        %v813 = vrot.slane %v799, %v812
        %v814 = vcombine.high %v790, 0.0
        %v815 = vcombine.high %v797, 0.0
        %v816 = vcombine.high %v806, 0.0
        %v817 = vcombine.high %v813, 0.0
        %v818 = vcombine.low %v790, %v797
        %v820 = vunpack.c.l.s4 1983009808
        %v821 = vunpack.c.0.s8 %v820
        %v822 = vlaneseq
        %v823 = vshrl.u32 %v822, 7
        %v824 = vsub.s32 %v821, %v823
        %v825 = vrot.slane %v818, %v824
        %v826 = vcombine.low %v814, %v815
        %v828 = vunpack.c.l.s4 1983009808
        %v829 = vunpack.c.0.s8 %v828
        %v830 = vlaneseq
        %v831 = vshrl.u32 %v830, 7
        %v832 = vsub.s32 %v829, %v831
        %v833 = vrot.slane %v826, %v832
        %v834 = vcombine.low %v806, %v813
        %v836 = vunpack.c.l.s4 1983009808
        %v837 = vunpack.c.0.s8 %v836
        %v838 = vlaneseq
        %v839 = vshrl.u32 %v838, 7
        %v840 = vsub.s32 %v837, %v839
        %v841 = vrot.slane %v834, %v840
        %v842 = vcombine.low %v816, %v817
        %v844 = vunpack.c.l.s4 1983009808
        %v845 = vunpack.c.0.s8 %v844
        %v846 = vlaneseq
        %v847 = vshrl.u32 %v846, 7
        %v848 = vsub.s32 %v845, %v847
        %v849 = vrot.slane %v842, %v848
        %v850 = vcombine.low %v825, %v833
        %v851 = vcombine.high %v825, %v833
        %v853 = vunpack.c.l.s4 1934713408
        %v854 = vunpack.c.0.s8 %v853
        %v855 = vlaneseq
        %v856 = vshrl.u32 %v855, 7
        %v857 = vsub.s32 %v854, %v856
        %v858 = vrot.slane %v850, %v857
        %v860 = vunpack.c.l.s4 1934713408
        %v861 = vunpack.c.0.s8 %v860
        %v862 = vlaneseq
        %v863 = vshrl.u32 %v862, 7
        %v864 = vsub.s32 %v861, %v863
        %v865 = vrot.slane %v851, %v864
        %v866 = vcombine.low %v841, %v849
        %v867 = vcombine.high %v841, %v849
        %v869 = vunpack.c.l.s4 1934713408
        %v870 = vunpack.c.0.s8 %v869
        %v871 = vlaneseq
        %v872 = vshrl.u32 %v871, 7
        %v873 = vsub.s32 %v870, %v872
        %v874 = vrot.slane %v866, %v873
        %v876 = vunpack.c.l.s4 1934713408
        %v877 = vunpack.c.0.s8 %v876
        %v878 = vlaneseq
        %v879 = vshrl.u32 %v878, 7
        %v880 = vsub.s32 %v877, %v879
        %v881 = vrot.slane %v867, %v880
        %v882 = vcombine.low %v858, %v874
        %v883 = vcombine.high %v858, %v874
        %v884 = vcombine.low %v865, %v881
        %v885 = vcombine.high %v865, %v881
        %887 = vrot.lane.b32.xlu0 %v655, 120
        %v888 = vpop.permute.xlu0 %887
        %890 = vrot.lane.b32.xlu0 %v655, 112
        %v891 = vpop.permute.xlu0 %890
        %893 = vrot.lane.b32.xlu0 %v655, 104
        %v894 = vpop.permute.xlu0 %893
        %v896 = vcombine.low %v655, %v891
        %v897 = vcombine.high %v655, %v891
        %v899 = vunpack.c.l.s4 1983009808
        %v900 = vunpack.c.0.s8 %v899
        %v901 = vlaneseq
        %v902 = vshrl.u32 %v901, 7
        %v903 = vsub.s32 %v900, %v902
        %v904 = vrot.slane %v896, %v903
        %v906 = vunpack.c.l.s4 1983009808
        %v907 = vunpack.c.0.s8 %v906
        %v908 = vlaneseq
        %v909 = vshrl.u32 %v908, 7
        %v910 = vsub.s32 %v907, %v909
        %v911 = vrot.slane %v897, %v910
        %v912 = vcombine.low %v888, %v894
        %v913 = vcombine.high %v888, %v894
        %v915 = vunpack.c.l.s4 1983009808
        %v916 = vunpack.c.0.s8 %v915
        %v917 = vlaneseq
        %v918 = vshrl.u32 %v917, 7
        %v919 = vsub.s32 %v916, %v918
        %v920 = vrot.slane %v912, %v919
        %v922 = vunpack.c.l.s4 1983009808
        %v923 = vunpack.c.0.s8 %v922
        %v924 = vlaneseq
        %v925 = vshrl.u32 %v924, 7
        %v926 = vsub.s32 %v923, %v925
        %v927 = vrot.slane %v913, %v926
        %v928 = vcombine.low %v904, %v920
        %v929 = vcombine.high %v904, %v920
        %v931 = vunpack.c.l.s4 1934713408
        %v932 = vunpack.c.0.s8 %v931
        %v933 = vlaneseq
        %v934 = vshrl.u32 %v933, 7
        %v935 = vsub.s32 %v932, %v934
        %v936 = vrot.slane %v928, %v935
        %v938 = vunpack.c.l.s4 1934713408
        %v939 = vunpack.c.0.s8 %v938
        %v940 = vlaneseq
        %v941 = vshrl.u32 %v940, 7
        %v942 = vsub.s32 %v939, %v941
        %v943 = vrot.slane %v929, %v942
        %v944 = vcombine.low %v911, %v927
        %v945 = vcombine.high %v911, %v927
        %v947 = vunpack.c.l.s4 1934713408
        %v948 = vunpack.c.0.s8 %v947
        %v949 = vlaneseq
        %v950 = vshrl.u32 %v949, 7
        %v951 = vsub.s32 %v948, %v950
        %v952 = vrot.slane %v944, %v951
        %v954 = vunpack.c.l.s4 1934713408
        %v955 = vunpack.c.0.s8 %v954
        %v956 = vlaneseq
        %v957 = vshrl.u32 %v956, 7
        %v958 = vsub.s32 %v955, %v957
        %v959 = vrot.slane %v945, %v958
        %v960 = vcombine.high %v936, 0.0
        %v961 = vcombine.high %v943, 0.0
        %v962 = vcombine.high %v952, 0.0
        %v963 = vcombine.high %v959, 0.0
        %v964 = vcombine.low %v936, %v943
        %v966 = vunpack.c.l.s4 1983009808
        %v967 = vunpack.c.0.s8 %v966
        %v968 = vlaneseq
        %v969 = vshrl.u32 %v968, 7
        %v970 = vsub.s32 %v967, %v969
        %v971 = vrot.slane %v964, %v970
        %v972 = vcombine.low %v960, %v961
        %v974 = vunpack.c.l.s4 1983009808
        %v975 = vunpack.c.0.s8 %v974
        %v976 = vlaneseq
        %v977 = vshrl.u32 %v976, 7
        %v978 = vsub.s32 %v975, %v977
        %v979 = vrot.slane %v972, %v978
        %v980 = vcombine.low %v952, %v959
        %v982 = vunpack.c.l.s4 1983009808
        %v983 = vunpack.c.0.s8 %v982
        %v984 = vlaneseq
        %v985 = vshrl.u32 %v984, 7
        %v986 = vsub.s32 %v983, %v985
        %v987 = vrot.slane %v980, %v986
        %v988 = vcombine.low %v962, %v963
        %v990 = vunpack.c.l.s4 1983009808
        %v991 = vunpack.c.0.s8 %v990
        %v992 = vlaneseq
        %v993 = vshrl.u32 %v992, 7
        %v994 = vsub.s32 %v991, %v993
        %v995 = vrot.slane %v988, %v994
        %v996 = vcombine.low %v971, %v979
        %v997 = vcombine.high %v971, %v979
        %v999 = vunpack.c.l.s4 1934713408
        %v1000 = vunpack.c.0.s8 %v999
        %v1001 = vlaneseq
        %v1002 = vshrl.u32 %v1001, 7
        %v1003 = vsub.s32 %v1000, %v1002
        %v1004 = vrot.slane %v996, %v1003
        %v1006 = vunpack.c.l.s4 1934713408
        %v1007 = vunpack.c.0.s8 %v1006
        %v1008 = vlaneseq
        %v1009 = vshrl.u32 %v1008, 7
        %v1010 = vsub.s32 %v1007, %v1009
        %v1011 = vrot.slane %v997, %v1010
        %v1012 = vcombine.low %v987, %v995
        %v1013 = vcombine.high %v987, %v995
        %v1015 = vunpack.c.l.s4 1934713408
        %v1016 = vunpack.c.0.s8 %v1015
        %v1017 = vlaneseq
        %v1018 = vshrl.u32 %v1017, 7
        %v1019 = vsub.s32 %v1016, %v1018
        %v1020 = vrot.slane %v1012, %v1019
        %v1022 = vunpack.c.l.s4 1934713408
        %v1023 = vunpack.c.0.s8 %v1022
        %v1024 = vlaneseq
        %v1025 = vshrl.u32 %v1024, 7
        %v1026 = vsub.s32 %v1023, %v1025
        %v1027 = vrot.slane %v1013, %v1026
        %v1028 = vcombine.low %v1004, %v1020
        %v1029 = vcombine.high %v1004, %v1020
        %v1030 = vcombine.low %v1011, %v1027
        %v1031 = vcombine.high %v1011, %v1027
        %1033 = vrot.lane.b32.xlu0 %v736, 120
        %v1034 = vpop.permute.xlu0 %1033
        %1036 = vrot.lane.b32.xlu0 %v736, 112
        %v1037 = vpop.permute.xlu0 %1036
        %1039 = vrot.lane.b32.xlu0 %v736, 104
        %v1040 = vpop.permute.xlu0 %1039
        %v1042 = vcombine.low %v736, %v1037
        %v1043 = vcombine.high %v736, %v1037
        %v1045 = vunpack.c.l.s4 1983009808
        %v1046 = vunpack.c.0.s8 %v1045
        %v1047 = vlaneseq
        %v1048 = vshrl.u32 %v1047, 7
        %v1049 = vsub.s32 %v1046, %v1048
        %v1050 = vrot.slane %v1042, %v1049
        %v1052 = vunpack.c.l.s4 1983009808
        %v1053 = vunpack.c.0.s8 %v1052
        %v1054 = vlaneseq
        %v1055 = vshrl.u32 %v1054, 7
        %v1056 = vsub.s32 %v1053, %v1055
        %v1057 = vrot.slane %v1043, %v1056
        %v1058 = vcombine.low %v1034, %v1040
        %v1059 = vcombine.high %v1034, %v1040
        %v1061 = vunpack.c.l.s4 1983009808
        %v1062 = vunpack.c.0.s8 %v1061
        %v1063 = vlaneseq
        %v1064 = vshrl.u32 %v1063, 7
        %v1065 = vsub.s32 %v1062, %v1064
        %v1066 = vrot.slane %v1058, %v1065
        %v1068 = vunpack.c.l.s4 1983009808
        %v1069 = vunpack.c.0.s8 %v1068
        %v1070 = vlaneseq
        %v1071 = vshrl.u32 %v1070, 7
        %v1072 = vsub.s32 %v1069, %v1071
        %v1073 = vrot.slane %v1059, %v1072
        %v1074 = vcombine.low %v1050, %v1066
        %v1075 = vcombine.high %v1050, %v1066
        %v1077 = vunpack.c.l.s4 1934713408
        %v1078 = vunpack.c.0.s8 %v1077
        %v1079 = vlaneseq
        %v1080 = vshrl.u32 %v1079, 7
        %v1081 = vsub.s32 %v1078, %v1080
        %v1082 = vrot.slane %v1074, %v1081
        %v1084 = vunpack.c.l.s4 1934713408
        %v1085 = vunpack.c.0.s8 %v1084
        %v1086 = vlaneseq
        %v1087 = vshrl.u32 %v1086, 7
        %v1088 = vsub.s32 %v1085, %v1087
        %v1089 = vrot.slane %v1075, %v1088
        %v1090 = vcombine.low %v1057, %v1073
        %v1091 = vcombine.high %v1057, %v1073
        %v1093 = vunpack.c.l.s4 1934713408
        %v1094 = vunpack.c.0.s8 %v1093
        %v1095 = vlaneseq
        %v1096 = vshrl.u32 %v1095, 7
        %v1097 = vsub.s32 %v1094, %v1096
        %v1098 = vrot.slane %v1090, %v1097
        %v1100 = vunpack.c.l.s4 1934713408
        %v1101 = vunpack.c.0.s8 %v1100
        %v1102 = vlaneseq
        %v1103 = vshrl.u32 %v1102, 7
        %v1104 = vsub.s32 %v1101, %v1103
        %v1105 = vrot.slane %v1091, %v1104
        %v1106 = vcombine.high %v1082, 0.0
        %v1107 = vcombine.high %v1089, 0.0
        %v1108 = vcombine.high %v1098, 0.0
        %v1109 = vcombine.high %v1105, 0.0
        %v1110 = vcombine.low %v1082, %v1089
        %v1112 = vunpack.c.l.s4 1983009808
        %v1113 = vunpack.c.0.s8 %v1112
        %v1114 = vlaneseq
        %v1115 = vshrl.u32 %v1114, 7
        %v1116 = vsub.s32 %v1113, %v1115
        %v1117 = vrot.slane %v1110, %v1116
        %v1118 = vcombine.low %v1106, %v1107
        %v1120 = vunpack.c.l.s4 1983009808
        %v1121 = vunpack.c.0.s8 %v1120
        %v1122 = vlaneseq
        %v1123 = vshrl.u32 %v1122, 7
        %v1124 = vsub.s32 %v1121, %v1123
        %v1125 = vrot.slane %v1118, %v1124
        %v1126 = vcombine.low %v1098, %v1105
        %v1128 = vunpack.c.l.s4 1983009808
        %v1129 = vunpack.c.0.s8 %v1128
        %v1130 = vlaneseq
        %v1131 = vshrl.u32 %v1130, 7
        %v1132 = vsub.s32 %v1129, %v1131
        %v1133 = vrot.slane %v1126, %v1132
        %v1134 = vcombine.low %v1108, %v1109
        %v1136 = vunpack.c.l.s4 1983009808
        %v1137 = vunpack.c.0.s8 %v1136
        %v1138 = vlaneseq
        %v1139 = vshrl.u32 %v1138, 7
        %v1140 = vsub.s32 %v1137, %v1139
        %v1141 = vrot.slane %v1134, %v1140
        %v1142 = vcombine.low %v1117, %v1125
        %v1143 = vcombine.high %v1117, %v1125
        %v1145 = vunpack.c.l.s4 1934713408
        %v1146 = vunpack.c.0.s8 %v1145
        %v1147 = vlaneseq
        %v1148 = vshrl.u32 %v1147, 7
        %v1149 = vsub.s32 %v1146, %v1148
        %v1150 = vrot.slane %v1142, %v1149
        %v1152 = vunpack.c.l.s4 1934713408
        %v1153 = vunpack.c.0.s8 %v1152
        %v1154 = vlaneseq
        %v1155 = vshrl.u32 %v1154, 7
        %v1156 = vsub.s32 %v1153, %v1155
        %v1157 = vrot.slane %v1143, %v1156
        %v1158 = vcombine.low %v1133, %v1141
        %v1159 = vcombine.high %v1133, %v1141
        %v1161 = vunpack.c.l.s4 1934713408
        %v1162 = vunpack.c.0.s8 %v1161
        %v1163 = vlaneseq
        %v1164 = vshrl.u32 %v1163, 7
        %v1165 = vsub.s32 %v1162, %v1164
        %v1166 = vrot.slane %v1158, %v1165
        %v1168 = vunpack.c.l.s4 1934713408
        %v1169 = vunpack.c.0.s8 %v1168
        %v1170 = vlaneseq
        %v1171 = vshrl.u32 %v1170, 7
        %v1172 = vsub.s32 %v1169, %v1171
        %v1173 = vrot.slane %v1159, %v1172
        %v1174 = vcombine.low %v1150, %v1166
        %v1175 = vcombine.high %v1150, %v1166
        %v1176 = vcombine.low %v1157, %v1173
        %v1177 = vcombine.high %v1157, %v1173
        %vm1178 = vcmask 64512
        %v1180 = vsel %vm1178, %v882, 0
        %v1183 = vsel %vm1178, %v1028, 0
        %1185 = vmatprep.subr.mxu0 0.0
        %1186 = vmatpush1.xpose.msra.mxu0 %v1183
        %1187 = vmatprep.subr.mxu0 0.0
        %1188 = vmatpush1.xpose.msra.mxu0 0.0
        %1189 = vmatprep.subr.mxu0 0.0
        %1190 = vmatpush1.xpose.msra.mxu0 0.0
        %1191 = vmatprep.subr.mxu0 0.0
        %1192 = vmatpush1.xpose.msra.mxu0 0.0
        %1193 = vmatprep.subr.mxu0 0.0
        %1194 = vmatpush1.xpose.msra.mxu0 0.0
        %1195 = vmatprep.subr.mxu0 0.0
        %1196 = vmatpush1.xpose.msra.mxu0 0.0
        %1197 = vmatprep.subr.mxu0 0.0
        %1198 = vmatpush1.xpose.msra.mxu0 0.0
        %1199 = vmatprep.subr.mxu0 0.0
        %1200 = vmatpush1.xpose.msra.mxu0 0.0
        %1201 = vmatprep.subr.mxu0 0.0
        %1202 = vmatpush1.xpose.msra.mxu0 0.0
        %1203 = vmatprep.subr.mxu0 0.0
        %1204 = vmatpush1.xpose.msra.mxu0 0.0
        %1205 = vmatprep.subr.mxu0 0.0
        %1206 = vmatpush1.xpose.msra.mxu0 0.0
        %1207 = vmatprep.subr.mxu0 0.0
        %1208 = vmatpush1.xpose.msra.mxu0 0.0
        %1209 = vmatprep.subr.mxu0 0.0
        %1210 = vmatpush1.xpose.msra.mxu0 0.0
        %1211 = vmatprep.subr.mxu0 0.0
        %1212 = vmatpush1.xpose.msra.mxu0 0.0
        %1213 = vmatprep.subr.mxu0 0.0
        %1214 = vmatpush1.xpose.msra.mxu0 0.0
        %1215 = vmatprep.subr.mxu0 0.0
        %1216 = vmatpush1.xpose.msra.mxu0 0.0
        %1217 = vmatprep.subr.mxu0 0.0
        %1218 = vmatpush1.xpose.msra.mxu0 0.0
        %1219 = vmatprep.subr.mxu0 0.0
        %1220 = vmatpush1.xpose.msra.mxu0 0.0
        %1221 = vmatprep.subr.mxu0 0.0
        %1222 = vmatpush1.xpose.msra.mxu0 0.0
        %1223 = vmatprep.subr.mxu0 0.0
        %1224 = vmatpush1.xpose.msra.mxu0 0.0
        %1225 = vmatprep.subr.mxu0 0.0
        %1226 = vmatpush1.xpose.msra.mxu0 0.0
        %1227 = vmatprep.subr.mxu0 0.0
        %1228 = vmatpush1.xpose.msra.mxu0 0.0
        %1229 = vmatprep.subr.mxu0 0.0
        %1230 = vmatpush1.xpose.msra.mxu0 0.0
        %1231 = vmatprep.subr.mxu0 0.0
        %1232 = vmatpush1.xpose.msra.mxu0 0.0
        %1233 = vmatprep.subr.mxu0 0.0
        %1234 = vmatpush1.xpose.msra.mxu0 0.0
        %1235 = vmatprep.subr.mxu0 0.0
        %1236 = vmatpush1.xpose.msra.mxu0 0.0
        %1237 = vmatprep.subr.mxu0 0.0
        %1238 = vmatpush1.xpose.msra.mxu0 0.0
        %1239 = vmatprep.subr.mxu0 0.0
        %1240 = vmatpush1.xpose.msra.mxu0 0.0
        %1241 = vmatprep.subr.mxu0 0.0
        %1242 = vmatpush1.xpose.msra.mxu0 0.0
        %1243 = vmatprep.subr.mxu0 0.0
        %1244 = vmatpush1.xpose.msra.mxu0 0.0
        %1245 = vmatprep.subr.mxu0 0.0
        %1246 = vmatpush1.xpose.msra.mxu0 0.0
        %1247 = vmatprep.subr.mxu0 0.0
        %1248 = vmatpush1.xpose.msra.mxu0 0.0
        %1249 = vmatprep.mubr.f32.mxu0 0.0
        %1250 = vmatmul.mubr.f32.gmra.mrb[0].mxu0 %v1180
        %v1251 = vpop.f32.mrb[0].mxu0
        %v1252 = vadd.f32 0.0, %v1251
        %v1253 = vpop.f32.mrb[0].mxu0
        %1254 = vdwg.mxu0
        %v1256 = vsel %vm1178, %v883, 0
        %v1259 = vsel %vm1178, %v1029, 0
        %1261 = vmatprep.subr.mxu0 0.0
        %1262 = vmatpush1.xpose.msra.mxu0 %v1259
        %1263 = vmatprep.subr.mxu0 0.0
        %1264 = vmatpush1.xpose.msra.mxu0 0.0
        %1265 = vmatprep.subr.mxu0 0.0
        %1266 = vmatpush1.xpose.msra.mxu0 0.0
        %1267 = vmatprep.subr.mxu0 0.0
        %1268 = vmatpush1.xpose.msra.mxu0 0.0
        %1269 = vmatprep.subr.mxu0 0.0
        %1270 = vmatpush1.xpose.msra.mxu0 0.0
        %1271 = vmatprep.subr.mxu0 0.0
        %1272 = vmatpush1.xpose.msra.mxu0 0.0
        %1273 = vmatprep.subr.mxu0 0.0
        %1274 = vmatpush1.xpose.msra.mxu0 0.0
        %1275 = vmatprep.subr.mxu0 0.0
        %1276 = vmatpush1.xpose.msra.mxu0 0.0
        %1277 = vmatprep.subr.mxu0 0.0
        %1278 = vmatpush1.xpose.msra.mxu0 0.0
        %1279 = vmatprep.subr.mxu0 0.0
        %1280 = vmatpush1.xpose.msra.mxu0 0.0
        %1281 = vmatprep.subr.mxu0 0.0
        %1282 = vmatpush1.xpose.msra.mxu0 0.0
        %1283 = vmatprep.subr.mxu0 0.0
        %1284 = vmatpush1.xpose.msra.mxu0 0.0
        %1285 = vmatprep.subr.mxu0 0.0
        %1286 = vmatpush1.xpose.msra.mxu0 0.0
        %1287 = vmatprep.subr.mxu0 0.0
        %1288 = vmatpush1.xpose.msra.mxu0 0.0
        %1289 = vmatprep.subr.mxu0 0.0
        %1290 = vmatpush1.xpose.msra.mxu0 0.0
        %1291 = vmatprep.subr.mxu0 0.0
        %1292 = vmatpush1.xpose.msra.mxu0 0.0
        %1293 = vmatprep.subr.mxu0 0.0
        %1294 = vmatpush1.xpose.msra.mxu0 0.0
        %1295 = vmatprep.subr.mxu0 0.0
        %1296 = vmatpush1.xpose.msra.mxu0 0.0
        %1297 = vmatprep.subr.mxu0 0.0
        %1298 = vmatpush1.xpose.msra.mxu0 0.0
        %1299 = vmatprep.subr.mxu0 0.0
        %1300 = vmatpush1.xpose.msra.mxu0 0.0
        %1301 = vmatprep.subr.mxu0 0.0
        %1302 = vmatpush1.xpose.msra.mxu0 0.0
        %1303 = vmatprep.subr.mxu0 0.0
        %1304 = vmatpush1.xpose.msra.mxu0 0.0
        %1305 = vmatprep.subr.mxu0 0.0
        %1306 = vmatpush1.xpose.msra.mxu0 0.0
        %1307 = vmatprep.subr.mxu0 0.0
        %1308 = vmatpush1.xpose.msra.mxu0 0.0
        %1309 = vmatprep.subr.mxu0 0.0
        %1310 = vmatpush1.xpose.msra.mxu0 0.0
        %1311 = vmatprep.subr.mxu0 0.0
        %1312 = vmatpush1.xpose.msra.mxu0 0.0
        %1313 = vmatprep.subr.mxu0 0.0
        %1314 = vmatpush1.xpose.msra.mxu0 0.0
        %1315 = vmatprep.subr.mxu0 0.0
        %1316 = vmatpush1.xpose.msra.mxu0 0.0
        %1317 = vmatprep.subr.mxu0 0.0
        %1318 = vmatpush1.xpose.msra.mxu0 0.0
        %1319 = vmatprep.subr.mxu0 0.0
        %1320 = vmatpush1.xpose.msra.mxu0 0.0
        %1321 = vmatprep.subr.mxu0 0.0
        %1322 = vmatpush1.xpose.msra.mxu0 0.0
        %1323 = vmatprep.subr.mxu0 0.0
        %1324 = vmatpush1.xpose.msra.mxu0 0.0
        %1325 = vmatprep.mubr.f32.mxu0 0.0
        %1326 = vmatmul.mubr.f32.gmra.mrb[0].mxu0 %v1256
        %v1327 = vpop.f32.mrb[0].mxu0
        %v1328 = vadd.f32 0.0, %v1327
        %v1329 = vpop.f32.mrb[0].mxu0
        %1330 = vdwg.mxu0
        %v1332 = vsel %vm1178, %v884, 0
        %v1335 = vsel %vm1178, %v1030, 0
        %1337 = vmatprep.subr.mxu0 0.0
        %1338 = vmatpush1.xpose.msra.mxu0 %v1335
        %1339 = vmatprep.subr.mxu0 0.0
        %1340 = vmatpush1.xpose.msra.mxu0 0.0
        %1341 = vmatprep.subr.mxu0 0.0
        %1342 = vmatpush1.xpose.msra.mxu0 0.0
        %1343 = vmatprep.subr.mxu0 0.0
        %1344 = vmatpush1.xpose.msra.mxu0 0.0
        %1345 = vmatprep.subr.mxu0 0.0
        %1346 = vmatpush1.xpose.msra.mxu0 0.0
        %1347 = vmatprep.subr.mxu0 0.0
        %1348 = vmatpush1.xpose.msra.mxu0 0.0
        %1349 = vmatprep.subr.mxu0 0.0
        %1350 = vmatpush1.xpose.msra.mxu0 0.0
        %1351 = vmatprep.subr.mxu0 0.0
        %1352 = vmatpush1.xpose.msra.mxu0 0.0
        %1353 = vmatprep.subr.mxu0 0.0
        %1354 = vmatpush1.xpose.msra.mxu0 0.0
        %1355 = vmatprep.subr.mxu0 0.0
        %1356 = vmatpush1.xpose.msra.mxu0 0.0
        %1357 = vmatprep.subr.mxu0 0.0
        %1358 = vmatpush1.xpose.msra.mxu0 0.0
        %1359 = vmatprep.subr.mxu0 0.0
        %1360 = vmatpush1.xpose.msra.mxu0 0.0
        %1361 = vmatprep.subr.mxu0 0.0
        %1362 = vmatpush1.xpose.msra.mxu0 0.0
        %1363 = vmatprep.subr.mxu0 0.0
        %1364 = vmatpush1.xpose.msra.mxu0 0.0
        %1365 = vmatprep.subr.mxu0 0.0
        %1366 = vmatpush1.xpose.msra.mxu0 0.0
        %1367 = vmatprep.subr.mxu0 0.0
        %1368 = vmatpush1.xpose.msra.mxu0 0.0
        %1369 = vmatprep.subr.mxu0 0.0
        %1370 = vmatpush1.xpose.msra.mxu0 0.0
        %1371 = vmatprep.subr.mxu0 0.0
        %1372 = vmatpush1.xpose.msra.mxu0 0.0
        %1373 = vmatprep.subr.mxu0 0.0
        %1374 = vmatpush1.xpose.msra.mxu0 0.0
        %1375 = vmatprep.subr.mxu0 0.0
        %1376 = vmatpush1.xpose.msra.mxu0 0.0
        %1377 = vmatprep.subr.mxu0 0.0
        %1378 = vmatpush1.xpose.msra.mxu0 0.0
        %1379 = vmatprep.subr.mxu0 0.0
        %1380 = vmatpush1.xpose.msra.mxu0 0.0
        %1381 = vmatprep.subr.mxu0 0.0
        %1382 = vmatpush1.xpose.msra.mxu0 0.0
        %1383 = vmatprep.subr.mxu0 0.0
        %1384 = vmatpush1.xpose.msra.mxu0 0.0
        %1385 = vmatprep.subr.mxu0 0.0
        %1386 = vmatpush1.xpose.msra.mxu0 0.0
        %1387 = vmatprep.subr.mxu0 0.0
        %1388 = vmatpush1.xpose.msra.mxu0 0.0
        %1389 = vmatprep.subr.mxu0 0.0
        %1390 = vmatpush1.xpose.msra.mxu0 0.0
        %1391 = vmatprep.subr.mxu0 0.0
        %1392 = vmatpush1.xpose.msra.mxu0 0.0
        %1393 = vmatprep.subr.mxu0 0.0
        %1394 = vmatpush1.xpose.msra.mxu0 0.0
        %1395 = vmatprep.subr.mxu0 0.0
        %1396 = vmatpush1.xpose.msra.mxu0 0.0
        %1397 = vmatprep.subr.mxu0 0.0
        %1398 = vmatpush1.xpose.msra.mxu0 0.0
        %1399 = vmatprep.subr.mxu0 0.0
        %1400 = vmatpush1.xpose.msra.mxu0 0.0
        %1401 = vmatprep.mubr.f32.mxu0 0.0
        %1402 = vmatmul.mubr.f32.gmra.mrb[0].mxu0 %v1332
        %v1403 = vpop.f32.mrb[0].mxu0
        %v1404 = vadd.f32 0.0, %v1403
        %v1405 = vpop.f32.mrb[0].mxu0
        %1406 = vdwg.mxu0
        %v1408 = vsel %vm1178, %v885, 0
        %v1411 = vsel %vm1178, %v1031, 0
        %1413 = vmatprep.subr.mxu0 0.0
        %1414 = vmatpush1.xpose.msra.mxu0 %v1411
        %1415 = vmatprep.subr.mxu0 0.0
        %1416 = vmatpush1.xpose.msra.mxu0 0.0
        %1417 = vmatprep.subr.mxu0 0.0
        %1418 = vmatpush1.xpose.msra.mxu0 0.0
        %1419 = vmatprep.subr.mxu0 0.0
        %1420 = vmatpush1.xpose.msra.mxu0 0.0
        %1421 = vmatprep.subr.mxu0 0.0
        %1422 = vmatpush1.xpose.msra.mxu0 0.0
        %1423 = vmatprep.subr.mxu0 0.0
        %1424 = vmatpush1.xpose.msra.mxu0 0.0
        %1425 = vmatprep.subr.mxu0 0.0
        %1426 = vmatpush1.xpose.msra.mxu0 0.0
        %1427 = vmatprep.subr.mxu0 0.0
        %1428 = vmatpush1.xpose.msra.mxu0 0.0
        %1429 = vmatprep.subr.mxu0 0.0
        %1430 = vmatpush1.xpose.msra.mxu0 0.0
        %1431 = vmatprep.subr.mxu0 0.0
        %1432 = vmatpush1.xpose.msra.mxu0 0.0
        %1433 = vmatprep.subr.mxu0 0.0
        %1434 = vmatpush1.xpose.msra.mxu0 0.0
        %1435 = vmatprep.subr.mxu0 0.0
        %1436 = vmatpush1.xpose.msra.mxu0 0.0
        %1437 = vmatprep.subr.mxu0 0.0
        %1438 = vmatpush1.xpose.msra.mxu0 0.0
        %1439 = vmatprep.subr.mxu0 0.0
        %1440 = vmatpush1.xpose.msra.mxu0 0.0
        %1441 = vmatprep.subr.mxu0 0.0
        %1442 = vmatpush1.xpose.msra.mxu0 0.0
        %1443 = vmatprep.subr.mxu0 0.0
        %1444 = vmatpush1.xpose.msra.mxu0 0.0
        %1445 = vmatprep.subr.mxu0 0.0
        %1446 = vmatpush1.xpose.msra.mxu0 0.0
        %1447 = vmatprep.subr.mxu0 0.0
        %1448 = vmatpush1.xpose.msra.mxu0 0.0
        %1449 = vmatprep.subr.mxu0 0.0
        %1450 = vmatpush1.xpose.msra.mxu0 0.0
        %1451 = vmatprep.subr.mxu0 0.0
        %1452 = vmatpush1.xpose.msra.mxu0 0.0
        %1453 = vmatprep.subr.mxu0 0.0
        %1454 = vmatpush1.xpose.msra.mxu0 0.0
        %1455 = vmatprep.subr.mxu0 0.0
        %1456 = vmatpush1.xpose.msra.mxu0 0.0
        %1457 = vmatprep.subr.mxu0 0.0
        %1458 = vmatpush1.xpose.msra.mxu0 0.0
        %1459 = vmatprep.subr.mxu0 0.0
        %1460 = vmatpush1.xpose.msra.mxu0 0.0
        %1461 = vmatprep.subr.mxu0 0.0
        %1462 = vmatpush1.xpose.msra.mxu0 0.0
        %1463 = vmatprep.subr.mxu0 0.0
        %1464 = vmatpush1.xpose.msra.mxu0 0.0
        %1465 = vmatprep.subr.mxu0 0.0
        %1466 = vmatpush1.xpose.msra.mxu0 0.0
        %1467 = vmatprep.subr.mxu0 0.0
        %1468 = vmatpush1.xpose.msra.mxu0 0.0
        %1469 = vmatprep.subr.mxu0 0.0
        %1470 = vmatpush1.xpose.msra.mxu0 0.0
        %1471 = vmatprep.subr.mxu0 0.0
        %1472 = vmatpush1.xpose.msra.mxu0 0.0
        %1473 = vmatprep.subr.mxu0 0.0
        %1474 = vmatpush1.xpose.msra.mxu0 0.0
        %1475 = vmatprep.subr.mxu0 0.0
        %1476 = vmatpush1.xpose.msra.mxu0 0.0
        %1477 = vmatprep.mubr.f32.mxu0 0.0
        %1478 = vmatmul.mubr.f32.gmra.mrb[0].mxu0 %v1408
        %v1479 = vpop.f32.mrb[0].mxu0
        %v1480 = vadd.f32 0.0, %v1479
        %v1481 = vpop.f32.mrb[0].mxu0
        %1482 = vdwg.mxu0
        %v1483 = vsel %vm1178, %v1252, -inf
        %1484 = vmax.xlane.f32.xlu0 %v1483
        %v1485 = vpop.xlane.xlu0 %1484
        %v1486 = vsel %vm1178, %v1328, -inf
        %1487 = vmax.xlane.f32.xlu0 %v1486
        %v1488 = vpop.xlane.xlu0 %1487
        %v1489 = vsel %vm1178, %v1404, -inf
        %1490 = vmax.xlane.f32.xlu0 %v1489
        %v1491 = vpop.xlane.xlu0 %1490
        %v1492 = vsel %vm1178, %v1480, -inf
        %1493 = vmax.xlane.f32.xlu0 %v1492
        %v1494 = vpop.xlane.xlu0 %1493
        %v1495 = vsub.f32 %v1252, %v1485
        %v1496 = vsub.f32 %v1328, %v1488
        %v1497 = vsub.f32 %v1404, %v1491
        %v1498 = vsub.f32 %v1480, %v1494
        %v1499 = vmul.f32 %v1495, 1.442695
        %v1500 = vpow.pop %v1499
        %v1501 = vmul.f32 %v1496, 1.442695
        %v1502 = vpow.pop %v1501
        %v1503 = vmul.f32 %v1497, 1.442695
        %v1504 = vpow.pop %v1503
        %v1505 = vmul.f32 %v1498, 1.442695
        %v1506 = vpow.pop %v1505
        %v1507 = vsel %vm1178, %v1500, 0.0
        %1508 = vadd.xlane.f32.xlu0 %v1507
        %v1509 = vpop.xlane.xlu0 %1508
        %v1510 = vsel %vm1178, %v1502, 0.0
        %1511 = vadd.xlane.f32.xlu0 %v1510
        %v1512 = vpop.xlane.xlu0 %1511
        %v1513 = vsel %vm1178, %v1504, 0.0
        %1514 = vadd.xlane.f32.xlu0 %v1513
        %v1515 = vpop.xlane.xlu0 %1514
        %v1516 = vsel %vm1178, %v1506, 0.0
        %1517 = vadd.xlane.f32.xlu0 %v1516
        %v1518 = vpop.xlane.xlu0 %1517
        %v1519 = vrcp.pop %v1509
        %v1520 = vrcp.pop %v1512
        %v1521 = vrcp.pop %v1515
        %v1522 = vrcp.pop %v1518
        %v1524 = vsel %vm1178, %v1500, 0
        %1526 = vmatprep.subr.mxu0 0.0
        %1527 = vmatpush1.msra.mxu0 %v1174
        %1528 = vmatprep.subr.mxu0 0.0
        %1529 = vmatpush1.msra.mxu0 0.0
        %1530 = vmatprep.subr.mxu0 0.0
        %1531 = vmatpush1.msra.mxu0 0.0
        %1532 = vmatprep.subr.mxu0 0.0
        %1533 = vmatpush1.msra.mxu0 0.0
        %1534 = vmatprep.subr.mxu0 0.0
        %1535 = vmatpush1.msra.mxu0 0.0
        %1536 = vmatprep.subr.mxu0 0.0
        %1537 = vmatpush1.msra.mxu0 0.0
        %1538 = vmatprep.subr.mxu0 0.0
        %1539 = vmatpush1.msra.mxu0 0.0
        %1540 = vmatprep.subr.mxu0 0.0
        %1541 = vmatpush1.msra.mxu0 0.0
        %1542 = vmatprep.subr.mxu0 0.0
        %1543 = vmatpush1.msra.mxu0 0.0
        %1544 = vmatprep.subr.mxu0 0.0
        %1545 = vmatpush1.msra.mxu0 0.0
        %1546 = vmatprep.subr.mxu0 0.0
        %1547 = vmatpush1.msra.mxu0 0.0
        %1548 = vmatprep.subr.mxu0 0.0
        %1549 = vmatpush1.msra.mxu0 0.0
        %1550 = vmatprep.subr.mxu0 0.0
        %1551 = vmatpush1.msra.mxu0 0.0
        %1552 = vmatprep.subr.mxu0 0.0
        %1553 = vmatpush1.msra.mxu0 0.0
        %1554 = vmatprep.subr.mxu0 0.0
        %1555 = vmatpush1.msra.mxu0 0.0
        %1556 = vmatprep.subr.mxu0 0.0
        %1557 = vmatpush1.msra.mxu0 0.0
        %1558 = vmatprep.subr.mxu0 0.0
        %1559 = vmatpush1.msra.mxu0 0.0
        %1560 = vmatprep.subr.mxu0 0.0
        %1561 = vmatpush1.msra.mxu0 0.0
        %1562 = vmatprep.subr.mxu0 0.0
        %1563 = vmatpush1.msra.mxu0 0.0
        %1564 = vmatprep.subr.mxu0 0.0
        %1565 = vmatpush1.msra.mxu0 0.0
        %1566 = vmatprep.subr.mxu0 0.0
        %1567 = vmatpush1.msra.mxu0 0.0
        %1568 = vmatprep.subr.mxu0 0.0
        %1569 = vmatpush1.msra.mxu0 0.0
        %1570 = vmatprep.subr.mxu0 0.0
        %1571 = vmatpush1.msra.mxu0 0.0
        %1572 = vmatprep.subr.mxu0 0.0
        %1573 = vmatpush1.msra.mxu0 0.0
        %1574 = vmatprep.subr.mxu0 0.0
        %1575 = vmatpush1.msra.mxu0 0.0
        %1576 = vmatprep.subr.mxu0 0.0
        %1577 = vmatpush1.msra.mxu0 0.0
        %1578 = vmatprep.subr.mxu0 0.0
        %1579 = vmatpush1.msra.mxu0 0.0
        %1580 = vmatprep.subr.mxu0 0.0
        %1581 = vmatpush1.msra.mxu0 0.0
        %1582 = vmatprep.subr.mxu0 0.0
        %1583 = vmatpush1.msra.mxu0 0.0
        %1584 = vmatprep.subr.mxu0 0.0
        %1585 = vmatpush1.msra.mxu0 0.0
        %1586 = vmatprep.subr.mxu0 0.0
        %1587 = vmatpush1.msra.mxu0 0.0
        %1588 = vmatprep.subr.mxu0 0.0
        %1589 = vmatpush1.msra.mxu0 0.0
        %1590 = vmatprep.mubr.f32.mxu0 0.0
        %1591 = vmatmul.mubr.f32.gmra.mrb[0].mxu0 %v1524
        %v1592 = vpop.f32.mrb[0].mxu0
        %v1593 = vadd.f32 0.0, %v1592
        %v1594 = vpop.f32.mrb[0].mxu0
        %1595 = vdwg.mxu0
        %v1597 = vsel %vm1178, %v1502, 0
        %1599 = vmatprep.subr.mxu0 0.0
        %1600 = vmatpush1.msra.mxu0 %v1175
        %1601 = vmatprep.subr.mxu0 0.0
        %1602 = vmatpush1.msra.mxu0 0.0
        %1603 = vmatprep.subr.mxu0 0.0
        %1604 = vmatpush1.msra.mxu0 0.0
        %1605 = vmatprep.subr.mxu0 0.0
        %1606 = vmatpush1.msra.mxu0 0.0
        %1607 = vmatprep.subr.mxu0 0.0
        %1608 = vmatpush1.msra.mxu0 0.0
        %1609 = vmatprep.subr.mxu0 0.0
        %1610 = vmatpush1.msra.mxu0 0.0
        %1611 = vmatprep.subr.mxu0 0.0
        %1612 = vmatpush1.msra.mxu0 0.0
        %1613 = vmatprep.subr.mxu0 0.0
        %1614 = vmatpush1.msra.mxu0 0.0
        %1615 = vmatprep.subr.mxu0 0.0
        %1616 = vmatpush1.msra.mxu0 0.0
        %1617 = vmatprep.subr.mxu0 0.0
        %1618 = vmatpush1.msra.mxu0 0.0
        %1619 = vmatprep.subr.mxu0 0.0
        %1620 = vmatpush1.msra.mxu0 0.0
        %1621 = vmatprep.subr.mxu0 0.0
        %1622 = vmatpush1.msra.mxu0 0.0
        %1623 = vmatprep.subr.mxu0 0.0
        %1624 = vmatpush1.msra.mxu0 0.0
        %1625 = vmatprep.subr.mxu0 0.0
        %1626 = vmatpush1.msra.mxu0 0.0
        %1627 = vmatprep.subr.mxu0 0.0
        %1628 = vmatpush1.msra.mxu0 0.0
        %1629 = vmatprep.subr.mxu0 0.0
        %1630 = vmatpush1.msra.mxu0 0.0
        %1631 = vmatprep.subr.mxu0 0.0
        %1632 = vmatpush1.msra.mxu0 0.0
        %1633 = vmatprep.subr.mxu0 0.0
        %1634 = vmatpush1.msra.mxu0 0.0
        %1635 = vmatprep.subr.mxu0 0.0
        %1636 = vmatpush1.msra.mxu0 0.0
        %1637 = vmatprep.subr.mxu0 0.0
        %1638 = vmatpush1.msra.mxu0 0.0
        %1639 = vmatprep.subr.mxu0 0.0
        %1640 = vmatpush1.msra.mxu0 0.0
        %1641 = vmatprep.subr.mxu0 0.0
        %1642 = vmatpush1.msra.mxu0 0.0
        %1643 = vmatprep.subr.mxu0 0.0
        %1644 = vmatpush1.msra.mxu0 0.0
        %1645 = vmatprep.subr.mxu0 0.0
        %1646 = vmatpush1.msra.mxu0 0.0
        %1647 = vmatprep.subr.mxu0 0.0
        %1648 = vmatpush1.msra.mxu0 0.0
        %1649 = vmatprep.subr.mxu0 0.0
        %1650 = vmatpush1.msra.mxu0 0.0
        %1651 = vmatprep.subr.mxu0 0.0
        %1652 = vmatpush1.msra.mxu0 0.0
        %1653 = vmatprep.subr.mxu0 0.0
        %1654 = vmatpush1.msra.mxu0 0.0
        %1655 = vmatprep.subr.mxu0 0.0
        %1656 = vmatpush1.msra.mxu0 0.0
        %1657 = vmatprep.subr.mxu0 0.0
        %1658 = vmatpush1.msra.mxu0 0.0
        %1659 = vmatprep.subr.mxu0 0.0
        %1660 = vmatpush1.msra.mxu0 0.0
        %1661 = vmatprep.subr.mxu0 0.0
        %1662 = vmatpush1.msra.mxu0 0.0
        %1663 = vmatprep.mubr.f32.mxu0 0.0
        %1664 = vmatmul.mubr.f32.gmra.mrb[0].mxu0 %v1597
        %v1665 = vpop.f32.mrb[0].mxu0
        %v1666 = vadd.f32 0.0, %v1665
        %v1667 = vpop.f32.mrb[0].mxu0
        %1668 = vdwg.mxu0
        %v1670 = vsel %vm1178, %v1504, 0
        %1672 = vmatprep.subr.mxu0 0.0
        %1673 = vmatpush1.msra.mxu0 %v1176
        %1674 = vmatprep.subr.mxu0 0.0
        %1675 = vmatpush1.msra.mxu0 0.0
        %1676 = vmatprep.subr.mxu0 0.0
        %1677 = vmatpush1.msra.mxu0 0.0
        %1678 = vmatprep.subr.mxu0 0.0
        %1679 = vmatpush1.msra.mxu0 0.0
        %1680 = vmatprep.subr.mxu0 0.0
        %1681 = vmatpush1.msra.mxu0 0.0
        %1682 = vmatprep.subr.mxu0 0.0
        %1683 = vmatpush1.msra.mxu0 0.0
        %1684 = vmatprep.subr.mxu0 0.0
        %1685 = vmatpush1.msra.mxu0 0.0
        %1686 = vmatprep.subr.mxu0 0.0
        %1687 = vmatpush1.msra.mxu0 0.0
        %1688 = vmatprep.subr.mxu0 0.0
        %1689 = vmatpush1.msra.mxu0 0.0
        %1690 = vmatprep.subr.mxu0 0.0
        %1691 = vmatpush1.msra.mxu0 0.0
        %1692 = vmatprep.subr.mxu0 0.0
        %1693 = vmatpush1.msra.mxu0 0.0
        %1694 = vmatprep.subr.mxu0 0.0
        %1695 = vmatpush1.msra.mxu0 0.0
        %1696 = vmatprep.subr.mxu0 0.0
        %1697 = vmatpush1.msra.mxu0 0.0
        %1698 = vmatprep.subr.mxu0 0.0
        %1699 = vmatpush1.msra.mxu0 0.0
        %1700 = vmatprep.subr.mxu0 0.0
        %1701 = vmatpush1.msra.mxu0 0.0
        %1702 = vmatprep.subr.mxu0 0.0
        %1703 = vmatpush1.msra.mxu0 0.0
        %1704 = vmatprep.subr.mxu0 0.0
        %1705 = vmatpush1.msra.mxu0 0.0
        %1706 = vmatprep.subr.mxu0 0.0
        %1707 = vmatpush1.msra.mxu0 0.0
        %1708 = vmatprep.subr.mxu0 0.0
        %1709 = vmatpush1.msra.mxu0 0.0
        %1710 = vmatprep.subr.mxu0 0.0
        %1711 = vmatpush1.msra.mxu0 0.0
        %1712 = vmatprep.subr.mxu0 0.0
        %1713 = vmatpush1.msra.mxu0 0.0
        %1714 = vmatprep.subr.mxu0 0.0
        %1715 = vmatpush1.msra.mxu0 0.0
        %1716 = vmatprep.subr.mxu0 0.0
        %1717 = vmatpush1.msra.mxu0 0.0
        %1718 = vmatprep.subr.mxu0 0.0
        %1719 = vmatpush1.msra.mxu0 0.0
        %1720 = vmatprep.subr.mxu0 0.0
        %1721 = vmatpush1.msra.mxu0 0.0
        %1722 = vmatprep.subr.mxu0 0.0
        %1723 = vmatpush1.msra.mxu0 0.0
        %1724 = vmatprep.subr.mxu0 0.0
        %1725 = vmatpush1.msra.mxu0 0.0
        %1726 = vmatprep.subr.mxu0 0.0
        %1727 = vmatpush1.msra.mxu0 0.0
        %1728 = vmatprep.subr.mxu0 0.0
        %1729 = vmatpush1.msra.mxu0 0.0
        %1730 = vmatprep.subr.mxu0 0.0
        %1731 = vmatpush1.msra.mxu0 0.0
        %1732 = vmatprep.subr.mxu0 0.0
        %1733 = vmatpush1.msra.mxu0 0.0
        %1734 = vmatprep.subr.mxu0 0.0
        %1735 = vmatpush1.msra.mxu0 0.0
        %1736 = vmatprep.mubr.f32.mxu0 0.0
        %1737 = vmatmul.mubr.f32.gmra.mrb[0].mxu0 %v1670
        %v1738 = vpop.f32.mrb[0].mxu0
        %v1739 = vadd.f32 0.0, %v1738
        %v1740 = vpop.f32.mrb[0].mxu0
        %1741 = vdwg.mxu0
        %v1743 = vsel %vm1178, %v1506, 0
        %1745 = vmatprep.subr.mxu0 0.0
        %1746 = vmatpush1.msra.mxu0 %v1177
        %1747 = vmatprep.subr.mxu0 0.0
        %1748 = vmatpush1.msra.mxu0 0.0
        %1749 = vmatprep.subr.mxu0 0.0
        %1750 = vmatpush1.msra.mxu0 0.0
        %1751 = vmatprep.subr.mxu0 0.0
        %1752 = vmatpush1.msra.mxu0 0.0
        %1753 = vmatprep.subr.mxu0 0.0
        %1754 = vmatpush1.msra.mxu0 0.0
        %1755 = vmatprep.subr.mxu0 0.0
        %1756 = vmatpush1.msra.mxu0 0.0
        %1757 = vmatprep.subr.mxu0 0.0
        %1758 = vmatpush1.msra.mxu0 0.0
        %1759 = vmatprep.subr.mxu0 0.0
        %1760 = vmatpush1.msra.mxu0 0.0
        %1761 = vmatprep.subr.mxu0 0.0
        %1762 = vmatpush1.msra.mxu0 0.0
        %1763 = vmatprep.subr.mxu0 0.0
        %1764 = vmatpush1.msra.mxu0 0.0
        %1765 = vmatprep.subr.mxu0 0.0
        %1766 = vmatpush1.msra.mxu0 0.0
        %1767 = vmatprep.subr.mxu0 0.0
        %1768 = vmatpush1.msra.mxu0 0.0
        %1769 = vmatprep.subr.mxu0 0.0
        %1770 = vmatpush1.msra.mxu0 0.0
        %1771 = vmatprep.subr.mxu0 0.0
        %1772 = vmatpush1.msra.mxu0 0.0
        %1773 = vmatprep.subr.mxu0 0.0
        %1774 = vmatpush1.msra.mxu0 0.0
        %1775 = vmatprep.subr.mxu0 0.0
        %1776 = vmatpush1.msra.mxu0 0.0
        %1777 = vmatprep.subr.mxu0 0.0
        %1778 = vmatpush1.msra.mxu0 0.0
        %1779 = vmatprep.subr.mxu0 0.0
        %1780 = vmatpush1.msra.mxu0 0.0
        %1781 = vmatprep.subr.mxu0 0.0
        %1782 = vmatpush1.msra.mxu0 0.0
        %1783 = vmatprep.subr.mxu0 0.0
        %1784 = vmatpush1.msra.mxu0 0.0
        %1785 = vmatprep.subr.mxu0 0.0
        %1786 = vmatpush1.msra.mxu0 0.0
        %1787 = vmatprep.subr.mxu0 0.0
        %1788 = vmatpush1.msra.mxu0 0.0
        %1789 = vmatprep.subr.mxu0 0.0
        %1790 = vmatpush1.msra.mxu0 0.0
        %1791 = vmatprep.subr.mxu0 0.0
        %1792 = vmatpush1.msra.mxu0 0.0
        %1793 = vmatprep.subr.mxu0 0.0
        %1794 = vmatpush1.msra.mxu0 0.0
        %1795 = vmatprep.subr.mxu0 0.0
        %1796 = vmatpush1.msra.mxu0 0.0
        %1797 = vmatprep.subr.mxu0 0.0
        %1798 = vmatpush1.msra.mxu0 0.0
        %1799 = vmatprep.subr.mxu0 0.0
        %1800 = vmatpush1.msra.mxu0 0.0
        %1801 = vmatprep.subr.mxu0 0.0
        %1802 = vmatpush1.msra.mxu0 0.0
        %1803 = vmatprep.subr.mxu0 0.0
        %1804 = vmatpush1.msra.mxu0 0.0
        %1805 = vmatprep.subr.mxu0 0.0
        %1806 = vmatpush1.msra.mxu0 0.0
        %1807 = vmatprep.subr.mxu0 0.0
        %1808 = vmatpush1.msra.mxu0 0.0
        %1809 = vmatprep.mubr.f32.mxu0 0.0
        %1810 = vmatmul.mubr.f32.gmra.mrb[0].mxu0 %v1743
        %v1811 = vpop.f32.mrb[0].mxu0
        %v1812 = vadd.f32 0.0, %v1811
        %v1813 = vpop.f32.mrb[0].mxu0
        %1814 = vdwg.mxu0
        %v1815 = vmul.f32 %v1593, %v1519
        %v1816 = vmul.f32 %v1666, %v1520
        %v1817 = vmul.f32 %v1739, %v1521
        %v1818 = vmul.f32 %v1812, %v1522
        %v1819 = vcombine.low %v1815, %v1817
        %v1820 = vcombine.high %v1815, %v1817
        %v1822 = vunpack.c.l.s4 1983009808
        %v1823 = vunpack.c.0.s8 %v1822
        %v1824 = vlaneseq
        %v1825 = vshrl.u32 %v1824, 7
        %v1826 = vsub.s32 %v1823, %v1825
        %v1827 = vrot.slane %v1819, %v1826
        %v1829 = vunpack.c.l.s4 1983009808
        %v1830 = vunpack.c.0.s8 %v1829
        %v1831 = vlaneseq
        %v1832 = vshrl.u32 %v1831, 7
        %v1833 = vsub.s32 %v1830, %v1832
        %v1834 = vrot.slane %v1820, %v1833
        %v1835 = vcombine.low %v1816, %v1818
        %v1836 = vcombine.high %v1816, %v1818
        %v1838 = vunpack.c.l.s4 1983009808
        %v1839 = vunpack.c.0.s8 %v1838
        %v1840 = vlaneseq
        %v1841 = vshrl.u32 %v1840, 7
        %v1842 = vsub.s32 %v1839, %v1841
        %v1843 = vrot.slane %v1835, %v1842
        %v1845 = vunpack.c.l.s4 1983009808
        %v1846 = vunpack.c.0.s8 %v1845
        %v1847 = vlaneseq
        %v1848 = vshrl.u32 %v1847, 7
        %v1849 = vsub.s32 %v1846, %v1848
        %v1850 = vrot.slane %v1836, %v1849
        %v1851 = vcombine.low %v1827, %v1843
        %v1852 = vcombine.high %v1827, %v1843
        %v1854 = vunpack.c.l.s4 1934713408
        %v1855 = vunpack.c.0.s8 %v1854
        %v1856 = vlaneseq
        %v1857 = vshrl.u32 %v1856, 7
        %v1858 = vsub.s32 %v1855, %v1857
        %v1859 = vrot.slane %v1851, %v1858
        %v1861 = vunpack.c.l.s4 1934713408
        %v1862 = vunpack.c.0.s8 %v1861
        %v1863 = vlaneseq
        %v1864 = vshrl.u32 %v1863, 7
        %v1865 = vsub.s32 %v1862, %v1864
        %v1866 = vrot.slane %v1852, %v1865
        %v1867 = vcombine.low %v1834, %v1850
        %v1868 = vcombine.high %v1834, %v1850
        %v1870 = vunpack.c.l.s4 1934713408
        %v1871 = vunpack.c.0.s8 %v1870
        %v1872 = vlaneseq
        %v1873 = vshrl.u32 %v1872, 7
        %v1874 = vsub.s32 %v1871, %v1873
        %v1875 = vrot.slane %v1867, %v1874
        %v1877 = vunpack.c.l.s4 1934713408
        %v1878 = vunpack.c.0.s8 %v1877
        %v1879 = vlaneseq
        %v1880 = vshrl.u32 %v1879, 7
        %v1881 = vsub.s32 %v1878, %v1880
        %v1882 = vrot.slane %v1868, %v1881
        %v1883 = vcombine.high %v1859, 0.0
        %v1884 = vcombine.high %v1866, 0.0
        %v1885 = vcombine.high %v1875, 0.0
        %v1886 = vcombine.high %v1882, 0.0
        %v1887 = vcombine.low %v1859, %v1866
        %v1889 = vunpack.c.l.s4 1983009808
        %v1890 = vunpack.c.0.s8 %v1889
        %v1891 = vlaneseq
        %v1892 = vshrl.u32 %v1891, 7
        %v1893 = vsub.s32 %v1890, %v1892
        %v1894 = vrot.slane %v1887, %v1893
        %v1895 = vcombine.low %v1883, %v1884
        %v1897 = vunpack.c.l.s4 1983009808
        %v1898 = vunpack.c.0.s8 %v1897
        %v1899 = vlaneseq
        %v1900 = vshrl.u32 %v1899, 7
        %v1901 = vsub.s32 %v1898, %v1900
        %v1902 = vrot.slane %v1895, %v1901
        %v1903 = vcombine.low %v1875, %v1882
        %v1905 = vunpack.c.l.s4 1983009808
        %v1906 = vunpack.c.0.s8 %v1905
        %v1907 = vlaneseq
        %v1908 = vshrl.u32 %v1907, 7
        %v1909 = vsub.s32 %v1906, %v1908
        %v1910 = vrot.slane %v1903, %v1909
        %v1911 = vcombine.low %v1885, %v1886
        %v1913 = vunpack.c.l.s4 1983009808
        %v1914 = vunpack.c.0.s8 %v1913
        %v1915 = vlaneseq
        %v1916 = vshrl.u32 %v1915, 7
        %v1917 = vsub.s32 %v1914, %v1916
        %v1918 = vrot.slane %v1911, %v1917
        %v1919 = vcombine.low %v1894, %v1902
        %v1920 = vcombine.high %v1894, %v1902
        %v1922 = vunpack.c.l.s4 1934713408
        %v1923 = vunpack.c.0.s8 %v1922
        %v1924 = vlaneseq
        %v1925 = vshrl.u32 %v1924, 7
        %v1926 = vsub.s32 %v1923, %v1925
        %v1927 = vrot.slane %v1919, %v1926
        %v1929 = vunpack.c.l.s4 1934713408
        %v1930 = vunpack.c.0.s8 %v1929
        %v1931 = vlaneseq
        %v1932 = vshrl.u32 %v1931, 7
        %v1933 = vsub.s32 %v1930, %v1932
        %v1934 = vrot.slane %v1920, %v1933
        %v1935 = vcombine.low %v1910, %v1918
        %v1936 = vcombine.high %v1910, %v1918
        %v1938 = vunpack.c.l.s4 1934713408
        %v1939 = vunpack.c.0.s8 %v1938
        %v1940 = vlaneseq
        %v1941 = vshrl.u32 %v1940, 7
        %v1942 = vsub.s32 %v1939, %v1941
        %v1943 = vrot.slane %v1935, %v1942
        %v1945 = vunpack.c.l.s4 1934713408
        %v1946 = vunpack.c.0.s8 %v1945
        %v1947 = vlaneseq
        %v1948 = vshrl.u32 %v1947, 7
        %v1949 = vsub.s32 %v1946, %v1948
        %v1950 = vrot.slane %v1936, %v1949
        %v1951 = vcombine.low %v1927, %v1943
        %v1952 = vcombine.high %v1927, %v1943
        %v1953 = vcombine.low %v1934, %v1950
        %v1954 = vcombine.high %v1934, %v1950
        %1956 = vrot.lane.b32.xlu0 %v1952, 8
        %v1957 = vpop.permute.xlu0 %1956
        %1960 = vrot.lane.b32.xlu0 %v1953, 16
        %v1961 = vpop.permute.xlu0 %1960
        %1964 = vrot.lane.b32.xlu0 %v1954, 24
        %v1965 = vpop.permute.xlu0 %1964
        %v1967 = vsel %vm1178, %v1951, %v1957
        %vm1968 = vcmask 130048
        %v1969 = vsel %vm1968, %v1967, %v1961
        %vm1970 = vcmask 195584
        %v1971 = vsel %vm1970, %v1969, %v1965
        %v1972 = vld [vmem:[#allocation11] sm:$0xff]
        %v1973 = vld [vmem:[#allocation11 + $0x8] sm:$0xff]
        %v1974 = vld [vmem:[#allocation11 + $0x10] sm:$0xff]
        %v1975 = vld [vmem:[#allocation11 + $0x18] sm:$0xff]
        %v1976 = vld [vmem:[%s9] sm:$0x1]
        %v1978 = vlaneseq
        %v1979 = vshrl.u32 %v1978, 7
        %v1980 = vsub.s32 0, %v1979
        %v1981 = vrot.slane %v1976, %v1980
        %v1984 = vsel %vm500, %v1971, 0
        %1986 = vmatprep.subr.mxu0 0.0
        %1987 = vmatpush1.msra.mxu0 %v1972
        %1988 = vmatprep.subr.mxu0 0.0
        %1989 = vmatpush1.msra.mxu0 %v1973
        %1990 = vmatprep.subr.mxu0 0.0
        %1991 = vmatpush1.msra.mxu0 %v1974
        %1992 = vmatprep.subr.mxu0 0.0
        %1993 = vmatpush1.msra.mxu0 %v1975
        %1994 = vmatprep.subr.mxu0 0.0
        %1995 = vmatpush1.msra.mxu0 0.0
        %1996 = vmatprep.subr.mxu0 0.0
        %1997 = vmatpush1.msra.mxu0 0.0
        %1998 = vmatprep.subr.mxu0 0.0
        %1999 = vmatpush1.msra.mxu0 0.0
        %2000 = vmatprep.subr.mxu0 0.0
        %2001 = vmatpush1.msra.mxu0 0.0
        %2002 = vmatprep.subr.mxu0 0.0
        %2003 = vmatpush1.msra.mxu0 0.0
        %2004 = vmatprep.subr.mxu0 0.0
        %2005 = vmatpush1.msra.mxu0 0.0
        %2006 = vmatprep.subr.mxu0 0.0
        %2007 = vmatpush1.msra.mxu0 0.0
        %2008 = vmatprep.subr.mxu0 0.0
        %2009 = vmatpush1.msra.mxu0 0.0
        %2010 = vmatprep.subr.mxu0 0.0
        %2011 = vmatpush1.msra.mxu0 0.0
        %2012 = vmatprep.subr.mxu0 0.0
        %2013 = vmatpush1.msra.mxu0 0.0
        %2014 = vmatprep.subr.mxu0 0.0
        %2015 = vmatpush1.msra.mxu0 0.0
        %2016 = vmatprep.subr.mxu0 0.0
        %2017 = vmatpush1.msra.mxu0 0.0
        %2018 = vmatprep.subr.mxu0 0.0
        %2019 = vmatpush1.msra.mxu0 0.0
        %2020 = vmatprep.subr.mxu0 0.0
        %2021 = vmatpush1.msra.mxu0 0.0
        %2022 = vmatprep.subr.mxu0 0.0
        %2023 = vmatpush1.msra.mxu0 0.0
        %2024 = vmatprep.subr.mxu0 0.0
        %2025 = vmatpush1.msra.mxu0 0.0
        %2026 = vmatprep.subr.mxu0 0.0
        %2027 = vmatpush1.msra.mxu0 0.0
        %2028 = vmatprep.subr.mxu0 0.0
        %2029 = vmatpush1.msra.mxu0 0.0
        %2030 = vmatprep.subr.mxu0 0.0
        %2031 = vmatpush1.msra.mxu0 0.0
        %2032 = vmatprep.subr.mxu0 0.0
        %2033 = vmatpush1.msra.mxu0 0.0
        %2034 = vmatprep.subr.mxu0 0.0
        %2035 = vmatpush1.msra.mxu0 0.0
        %2036 = vmatprep.subr.mxu0 0.0
        %2037 = vmatpush1.msra.mxu0 0.0
        %2038 = vmatprep.subr.mxu0 0.0
        %2039 = vmatpush1.msra.mxu0 0.0
        %2040 = vmatprep.subr.mxu0 0.0
        %2041 = vmatpush1.msra.mxu0 0.0
        %2042 = vmatprep.subr.mxu0 0.0
        %2043 = vmatpush1.msra.mxu0 0.0
        %2044 = vmatprep.subr.mxu0 0.0
        %2045 = vmatpush1.msra.mxu0 0.0
        %2046 = vmatprep.subr.mxu0 0.0
        %2047 = vmatpush1.msra.mxu0 0.0
        %2048 = vmatprep.subr.mxu0 0.0
        %2049 = vmatpush1.msra.mxu0 0.0
        %2050 = vmatprep.mubr.f32.mxu0 0.0
        %2051 = vmatmul.mubr.f32.gmra.mrb[0].mxu0 %v1984
        %v2052 = vpop.f32.mrb[0].mxu0
        %v2053 = vadd.f32 %v1981, %v2052
        %v2054 = vpop.f32.mrb[0].mxu0
        %2055 = vdwg.mxu0
        %2056 = vst.msk [vmem:[%s486] sm:$0xff] %vm500, %v2053
        %s2057 = sand.u32 %s276, 1
        %s2058 = scalar_lea.sflag [#allocation4], %s2057
        %s2059 = sand.u32 %s276, 1
        %s2060 = smul.addr %s2059, 8
        %s2061 = scalar_lea.vmem [#allocation13], %s2060
        // Predicated region
        $region85: #{tpu_custom_call.1} parent=59 // pred_check
          %p2062 = pneg %p286
        $region86: #{tpu_custom_call.1} parent=59 // pred_check_branch
          %2064 = sbr.rel (%p2062) target = $region88
        $region87: #{tpu_custom_call.1} parent=59 // pred_region
          %s2066 = ssub.s32 128, 128
          %2067 = vsyncadd %s2058, %s2066
          %s2068 = sadd.s32 %s37, %s36
          %s2069 = smul.addr %s2068, 128
          %s2070 = scalar_lea.hbm %s10, %s2069
          %s2072 = sshll.u32 %s2061, 4
          %s2073 = int_to_ptr.vmem [resolvable:$true] %s2072
          %2075 = dma.vmem_to_hbm [thread:$0]  %s2073, 128, %s2070, %s2058
        $region88: #{tpu_custom_call.1} parent=59 // pred_fallthru
          _
      $region60: #{tpu_custom_call.1} parent=5 // pred_fallthru
        _
      %p2076 = scmp.le.s32.totalorder 2, %s27
      // Predicated region
      $region89: #{tpu_custom_call.1} parent=5 // pred_check
        %p2077 = pneg %p2076
      $region90: #{tpu_custom_call.1} parent=5 // pred_check_branch
        %2079 = sbr.rel (%p2077) target = $region92
      $region91: #{tpu_custom_call.1} parent=5 // pred_region
        %s2080 = ssub.s32 %s27, 2
        // Predicated region
        $region93: #{tpu_custom_call.1} parent=91 // pred_check
          %p2081 = pneg %p292
        $region94: #{tpu_custom_call.1} parent=91 // pred_check_branch
          %2083 = sbr.rel (%p2081) target = $region96
        $region95: #{tpu_custom_call.1} parent=91 // pred_region
          %s2084 = sand.u32 %s277, 1
          %s2085 = scalar_lea.sflag [#allocation4], %s2084
          %s2086 = sand.u32 %s277, 1
          %s2087 = smul.addr %s2086, 8
          %s2088 = scalar_lea.vmem [#allocation13], %s2087
          %2089 = dma.done %s2085, 128
        $region96: #{tpu_custom_call.1} parent=91 // pred_fallthru
          _
      $region92: #{tpu_custom_call.1} parent=5 // pred_fallthru
        _
    $region6: #{tpu_custom_call.1} parent=1 // loop_footer
      %s31 = sadd.s32 1, %s27
    $region7: #{tpu_custom_call.1} parent=1 // loop_footer_branch
      %26 = sbr.rel target = $region3
    $region8: #{tpu_custom_call.1} parent=1 // loop_exit
      _
    %2090 = vsyncpa [#allocation3], 1
    %s2091 = scalar_lea.sflag [#allocation3], 1
    %2092 = vsyncpa %s2091, 1
    %2093 = vsyncpa [#allocation6], 1
    %s2094 = scalar_lea.sflag [#allocation6], 1
    %2095 = vsyncpa %s2094, 1
    %2096 = vsyncpa [#allocation9], 1
    %2097 = vsyncpa [#allocation12], 1
    %2098 = vsyncpa [#allocation4], 1
    %s2099 = scalar_lea.sflag [#allocation4], 1
    %2100 = vsyncpa %s2099, 1

</llo_original>
